<compile_context>
chip_gen: v7x
topology: tpu7x:2x2x1
jax: 0.10.0
libtpu: 0.0.40
codegen_flags: <defaults>
</compile_context>

<pallas_src>
import functools
import math

import jax
import jax.numpy as jnp
from jax.experimental import pallas as pl
from jax.experimental.pallas import tpu as pltpu


# ----------------------------------------------------------------------------
# helpers
# ----------------------------------------------------------------------------
def _round_up(x: int, m: int) -> int:
    return ((x + m - 1) // m) * m


def _gelu_tanh(x):
    # tanh-approximate GELU (robust Mosaic lowering: VPU + EUP tanh).
    # TODO(synk): PyTorch's default GELU is the exact erf form; the tanh
    # approximation differs by <1e-3 and is used here inside the kernels.
    c = math.sqrt(2.0 / math.pi)
    return 0.5 * x * (1.0 + jnp.tanh(c * (x + 0.044715 * (x * x * x))))


# ----------------------------------------------------------------------------
# 1) PositionalEncoding:  x[S, B, D] + pe[:S]   (dropout = identity)
# ----------------------------------------------------------------------------
def _pe_add_kernel(x_ref, pe_ref, o_ref):
    # lane-dense elementwise add on a (tS, B*D) row tile
    o_ref[...] = x_ref[...] + pe_ref[...]


def make_positional_encoding(d_model: int, max_len: int = 5000) -> jnp.ndarray:
    """pe buffer identical to the PyTorch __init__, shape (max_len, d_model)."""
    position = jnp.arange(max_len, dtype=jnp.float32)[:, None]
    div_term = jnp.exp(jnp.arange(0, d_model, 2, dtype=jnp.float32)
                       * (-math.log(10000.0) / d_model))
    pe = jnp.zeros((max_len, d_model), jnp.float32)
    pe = pe.at[:, 0::2].set(jnp.sin(position * div_term))
    pe = pe.at[:, 1::2].set(jnp.cos(position * div_term))
    return pe


@functools.partial(jax.jit,
                   static_argnames=("target_tile_bytes", "min_elems_for_pallas"))
def positional_encoding_add(x, pe2d, *, target_tile_bytes=2 * 1024 * 1024,
                            min_elems_for_pallas=2048):
    """x: (S, B, D) seq-first (PyTorch layout); pe2d: (max_len, D).

    Returns x + pe2d[:S, None, :] with dropout as identity (eval mode).
    """
    S, B, D = x.shape
    if S * B * D < min_elems_for_pallas:
        # pallas_call fixed overhead dwarfs a tiny add -> plain XLA
        return x + pe2d[:S][:, None, :]

    L = B * D
    x2d = x.reshape(S, L)                                   # lane-dense view
    pe_slab = jnp.tile(pe2d[:S], (1, B)).astype(x.dtype)    # (S, B*D), small

    row_bytes = L * x.dtype.itemsize
    t_s = max(8, (target_tile_bytes // max(row_bytes, 1)) // 8 * 8)
    t_s = min(t_s, S)   # t_s is a multiple of 8, or equals the full S

    out2d = pl.pallas_call(
        _pe_add_kernel,
        out_shape=jax.ShapeDtypeStruct((S, L), x.dtype),
        grid=(pl.cdiv(S, t_s),),
        in_specs=[
            pl.BlockSpec((t_s, L), lambda i: (i, 0)),
            pl.BlockSpec((t_s, L), lambda i: (i, 0)),
        ],
        out_specs=pl.BlockSpec((t_s, L), lambda i: (i, 0)),
        input_output_aliases={0: 0},
        compiler_params=pltpu.CompilerParams(dimension_semantics=("parallel",)),
    )(x2d, pe_slab)
    return out2d.reshape(S, B, D)


# ----------------------------------------------------------------------------
# 2) Linear (+ bias, optional fused GELU / tanh) as a tiled MXU matmul kernel
# ----------------------------------------------------------------------------
def _linear_kernel(x_ref, w_ref, b_ref, o_ref, acc_ref, *, activation):
    @pl.when(pl.program_id(1) == 0)
    def _init():
        acc_ref[...] = jnp.zeros_like(acc_ref)

    acc_ref[...] += jnp.dot(x_ref[...], w_ref[...],
                            preferred_element_type=jnp.float32)

    @pl.when(pl.program_id(1) == pl.num_programs(1) - 1)
    def _finalize():
        y = acc_ref[...] + b_ref[...].astype(jnp.float32)
        if activation == "gelu":
            y = _gelu_tanh(y)
        elif activation == "tanh":
            y = jnp.tanh(y)
        o_ref[...] = y.astype(o_ref.dtype)


def _pick_tile(dim_padded: int, preferred: int = 512) -> int:
    for t in (preferred, 256, 128):
        if dim_padded % t == 0:
            return min(t, dim_padded)
    return dim_padded


@functools.partial(jax.jit, static_argnames=("activation",))
def pallas_linear(x, w, b, *, activation=None):
    """y = activation(x @ w + b).  x: (..., K), w: (K, N), b: (N,)."""
    *lead, K = x.shape
    M = int(math.prod(lead)) if lead else 1
    N = w.shape[1]
    x2d = x.reshape(M, K)

    Mp = _round_up(M, 8)
    Kp = _round_up(K, 128)
    Np = _round_up(N, 128)
    xp = jnp.pad(x2d, ((0, Mp - M), (0, Kp - K)))
    wp = jnp.pad(w, ((0, Kp - K), (0, Np - N)))
    bp = jnp.pad(b, (0, Np - N)).reshape(1, Np)

    tk = _pick_tile(Kp)
    tn = _pick_tile(Np)

    out = pl.pallas_call(
        functools.partial(_linear_kernel, activation=activation),
        out_shape=jax.ShapeDtypeStruct((Mp, Np), x.dtype),
        grid=(Np // tn, Kp // tk),                       # reduction axis last
        in_specs=[
            pl.BlockSpec((Mp, tk), lambda n, k: (0, k)),
            pl.BlockSpec((tk, tn), lambda n, k: (k, n)),
            pl.BlockSpec((1, tn), lambda n, k: (0, n)),
        ],
        out_specs=pl.BlockSpec((Mp, tn), lambda n, k: (0, n)),
        scratch_shapes=[pltpu.VMEM((Mp, tn), jnp.float32)],
        compiler_params=pltpu.CompilerParams(
            dimension_semantics=("parallel", "arbitrary")),
    )(xp, wp, bp)
    return out[:M, :N].reshape(*lead, N)


# ----------------------------------------------------------------------------
# 3) LayerNorm (+ optional fused GELU) as a row-tiled Pallas kernel
# ----------------------------------------------------------------------------
def _layernorm_kernel(x_ref, g_ref, b_ref, o_ref, *, eps, activation):
    x = x_ref[...].astype(jnp.float32)
    mean = jnp.mean(x, axis=-1, keepdims=True)
    xc = x - mean
    var = jnp.mean(xc * xc, axis=-1, keepdims=True)
    y = xc * jax.lax.rsqrt(var + eps)
    y = y * g_ref[...].astype(jnp.float32) + b_ref[...].astype(jnp.float32)
    if activation == "gelu":
        y = _gelu_tanh(y)
    o_ref[...] = y.astype(o_ref.dtype)


@functools.partial(jax.jit, static_argnames=("eps", "activation"))
def pallas_layernorm(x, gamma, beta, *, eps=1e-5, activation=None):
    *lead, D = x.shape
    M = int(math.prod(lead)) if lead else 1
    x2d = x.reshape(M, D)
    Mp = _round_up(M, 8)
    xp = jnp.pad(x2d, ((0, Mp - M), (0, 0)))
    g2 = gamma.reshape(1, D)
    b2 = beta.reshape(1, D)

    t_r = min(Mp, 1024)   # multiple of 8 (or equal to full padded rows)
    out = pl.pallas_call(
        functools.partial(_layernorm_kernel, eps=eps, activation=activation),
        out_shape=jax.ShapeDtypeStruct((Mp, D), x.dtype),
        grid=(pl.cdiv(Mp, t_r),),
        in_specs=[
            pl.BlockSpec((t_r, D), lambda i: (i, 0)),
            pl.BlockSpec((1, D), lambda i: (0, 0)),
            pl.BlockSpec((1, D), lambda i: (0, 0)),
        ],
        out_specs=pl.BlockSpec((t_r, D), lambda i: (i, 0)),
        compiler_params=pltpu.CompilerParams(dimension_semantics=("parallel",)),
    )(xp, g2, b2)
    return out[:M].reshape(*lead, D)


# ----------------------------------------------------------------------------
# 4) GestureViT (transformer encoder) forward — glue in JAX, compute in Pallas
# ----------------------------------------------------------------------------
def _multi_head_attention(x, p, nhead):
    # TODO(synk): replace the softmax core with a flash-attention Pallas kernel
    # for production sequence lengths; at seq_len=8 the (B,H,8,8) score tile is
    # below the (8,128) vreg granule so the core stays in plain XLA here.
    B, S, D = x.shape
    hd = D // nhead
    qkv = pallas_linear(x, p["attn_in"]["w"], p["attn_in"]["b"])     # (B, S, 3D)
    q, k, v = jnp.split(qkv, 3, axis=-1)

    def heads(t):
        return t.reshape(B, S, nhead, hd).transpose(0, 2, 1, 3)      # (B, H, S, hd)

    q, k, v = heads(q), heads(k), heads(v)
    scores = jnp.einsum("bhqd,bhkd->bhqk", q, k) * (1.0 / math.sqrt(hd))
    attn = jax.nn.softmax(scores, axis=-1)
    ctx = jnp.einsum("bhqk,bhkd->bhqd", attn, v)
    ctx = ctx.transpose(0, 2, 1, 3).reshape(B, S, D)
    return pallas_linear(ctx, p["attn_out"]["w"], p["attn_out"]["b"])


def _encoder_layer(x, p, nhead):
    # PyTorch TransformerEncoderLayer, norm_first=False (post-norm), eval mode.
    a = _multi_head_attention(x, p, nhead)
    x = pallas_layernorm(x + a, p["ln1"]["g"], p["ln1"]["b"])
    h = pallas_linear(x, p["ff1"]["w"], p["ff1"]["b"], activation="gelu")
    h = pallas_linear(h, p["ff2"]["w"], p["ff2"]["b"])
    x = pallas_layernorm(x + h, p["ln2"]["g"], p["ln2"]["b"])
    return x


def gesture_vit_forward(params, x, *, nhead=8):
    """x: (B, S, input_dim) -> (logits (B, C), attention (B, D))."""
    h = pallas_linear(x, params["in_proj"]["w"], params["in_proj"]["b"])  # (B,S,D)
    # mirror PyTorch: seq-first for positional encoding, then back to batch-first
    h = jnp.transpose(h, (1, 0, 2))
    h = positional_encoding_add(h, params["pe"])
    h = jnp.transpose(h, (1, 0, 2))
    for lp in params["layers"]:
        h = _encoder_layer(h, lp, nhead)
    pooled = jnp.mean(h, axis=1)                  # AdaptiveAvgPool1d(1) over seq
    c = pallas_layernorm(pooled, params["cls_ln"]["g"], params["cls_ln"]["b"])
    c = pallas_linear(c, params["cls1"]["w"], params["cls1"]["b"], activation="gelu")
    logits = pallas_linear(c, params["cls2"]["w"], params["cls2"]["b"])
    attention_weights = jnp.mean(h, axis=1)
    return logits, attention_weights


# ----------------------------------------------------------------------------
# 5) MotionSynthesizer forward
# ----------------------------------------------------------------------------
def motion_synthesizer_forward(params, gesture_classes, sequence_length=30):
    x = params["embedding"][gesture_classes]                      # (B, E)
    for lp in params["layers"]:                                   # Linear->LN->GELU
        x = pallas_linear(x, lp["lin"]["w"], lp["lin"]["b"])
        x = pallas_layernorm(x, lp["ln"]["g"], lp["ln"]["b"], activation="gelu")
    x = pallas_linear(x, params["op1"]["w"], params["op1"]["b"], activation="gelu")
    base = pallas_linear(x, params["op2"]["w"], params["op2"]["b"], activation="tanh")
    C = base.shape[-1]
    motion = jnp.repeat(base[:, None, :], sequence_length, axis=1)  # (B, T, C)
    # depthwise temporal smoothing conv (kernel 5, padding 2, groups=C)
    # TODO(synk): port to a Pallas kernel; tiny (C=63, k=5) so plain lax.conv here.
    m = motion.transpose(0, 2, 1)                                   # (B, C, T)
    sm = jax.lax.conv_general_dilated(
        m, params["conv_w"], window_strides=(1,), padding=((2, 2),),
        dimension_numbers=("NCH", "OIH", "NCH"), feature_group_count=C)
    sm = sm + params["conv_b"][None, :, None]
    return sm.transpose(0, 2, 1)                                    # (B, T, C)


# ----------------------------------------------------------------------------
# 6) AdvancedGestureModel forward
# ----------------------------------------------------------------------------
def advanced_gesture_model_forward(params, x, *, generate_motion=False,
                                   motion_length=30, nhead=8):
    logits, attention = gesture_vit_forward(params["vit"], x, nhead=nhead)
    results = {"logits": logits, "attention": attention}
    if generate_motion:
        predicted = jnp.argmax(logits, axis=1)
        results["motion"] = motion_synthesizer_forward(
            params["synth"], predicted, motion_length)
    return results


# ----------------------------------------------------------------------------
# deterministic parameter construction (stands in for torch state_dict)
# ----------------------------------------------------------------------------
def init_advanced_gesture_model(key, *, input_dim=21, d_model=256, nhead=8,
                                num_transformer_layers=6, num_classes=86,
                                synthesis_hidden_dim=512, num_synthesis_layers=4,
                                max_sequence_length=100):
    del nhead
    keys = iter(jax.random.split(key, 128))

    def dense(din, dout):
        return {"w": jax.random.normal(next(keys), (din, dout), jnp.float32) * 0.02,
                "b": jnp.zeros((dout,), jnp.float32)}

    def ln(d):
        return {"g": jnp.ones((d,), jnp.float32), "b": jnp.zeros((d,), jnp.float32)}

    vit = {
        "in_proj": dense(input_dim, d_model),
        "pe": make_positional_encoding(d_model, max_sequence_length),
        "layers": [
            {"attn_in": dense(d_model, 3 * d_model),
             "attn_out": dense(d_model, d_model),
             "ln1": ln(d_model),
             "ff1": dense(d_model, 4 * d_model),
             "ff2": dense(4 * d_model, d_model),
             "ln2": ln(d_model)}
            for _ in range(num_transformer_layers)
        ],
        "cls_ln": ln(d_model),
        "cls1": dense(d_model, d_model // 2),
        "cls2": dense(d_model // 2, num_classes),
    }

    output_dim = input_dim * 3
    synth_layers = []
    for i in range(num_synthesis_layers):
        din = d_model if i == 0 else synthesis_hidden_dim
        synth_layers.append({"lin": dense(din, synthesis_hidden_dim),
                             "ln": ln(synthesis_hidden_dim)})
    synth = {
        "embedding": jax.random.normal(next(keys), (num_classes, d_model),
                                       jnp.float32) * 0.02,
        "layers": synth_layers,
        "op1": dense(synthesis_hidden_dim, synthesis_hidden_dim // 2),
        "op2": dense(synthesis_hidden_dim // 2, output_dim),
        "conv_w": jax.random.normal(next(keys), (output_dim, 1, 5), jnp.float32) * 0.02,
        "conv_b": jnp.zeros((output_dim,), jnp.float32),
    }
    return {"vit": vit, "synth": synth}


# ----------------------------------------------------------------------------
# main
# ----------------------------------------------------------------------------
if __name__ == "__main__":
    root = jax.random.PRNGKey(0)
    k_pe, k_lin, k_ln, k_in, k_params = jax.random.split(root, 5)

    # (a) standalone check of the optimized PositionalEncoding kernel at a
    #     pipeline-exercising size (row-tiled grid > 1, lane width 1024).
    S, B, D = 2048, 4, 256
    x_big = jax.random.normal(k_pe, (S, B, D), jnp.float32)
    pe_big = make_positional_encoding(D, max_len=S)
    out_big = jax.block_until_ready(positional_encoding_add(x_big, pe_big))
    ref_big = x_big + pe_big[:S][:, None, :]
    assert jnp.allclose(out_big, ref_big, atol=1e-5), "PE kernel mismatch"

    # (b) unit checks of the Pallas linear / layernorm building blocks.
    ka, kb = jax.random.split(k_lin)
    xt = jax.random.normal(ka, (16, 21), jnp.float32)
    wt = jax.random.normal(kb, (21, 256), jnp.float32) * 0.1
    bt = jnp.linspace(-1.0, 1.0, 256, dtype=jnp.float32)
    ref = xt @ wt + bt
    assert jnp.allclose(pallas_linear(xt, wt, bt), ref, atol=1e-4, rtol=1e-4), \
        "linear kernel mismatch"
    assert jnp.allclose(pallas_linear(xt, wt, bt, activation="gelu"),
                        jax.nn.gelu(ref, approximate=True),
                        atol=1e-4, rtol=1e-4), "fused gelu mismatch"

    xl = jax.random.normal(k_ln, (16, 256), jnp.float32)
    g = jnp.full((256,), 1.3, jnp.float32)
    bb = jnp.full((256,), 0.1, jnp.float32)
    mu = xl.mean(-1, keepdims=True)
    var = ((xl - mu) ** 2).mean(-1, keepdims=True)
    ln_ref = (xl - mu) / jnp.sqrt(var + 1e-5) * g + bb
    assert jnp.allclose(pallas_layernorm(xl, g, bb), ln_ref, atol=1e-4), \
        "layernorm kernel mismatch"

    # (c) full AdvancedGestureModel forward at small, module-consistent shapes.
    batch, seq_len, input_dim = 2, 8, 21
    params = init_advanced_gesture_model(
        k_params, input_dim=input_dim, d_model=256, nhead=8,
        num_transformer_layers=6, num_classes=86,
        synthesis_hidden_dim=512, num_synthesis_layers=4, max_sequence_length=100)
    x = jax.random.normal(k_in, (batch, seq_len, input_dim), jnp.float32)

    results = advanced_gesture_model_forward(
        params, x, generate_motion=True, motion_length=30, nhead=8)
    results = jax.block_until_ready(results)

    assert results["logits"].shape == (batch, 86)
    assert results["attention"].shape == (batch, 256)
    assert results["motion"].shape == (batch, 30, 63)
    for v in results.values():
        assert bool(jnp.all(jnp.isfinite(v))), "non-finite output"

    print("KERNEL_OK")
</pallas_src>

<mosaic_0001>
module attributes {stable_mosaic.version = 11 : i64} {
  func.func @_pe_add_kernel(%arg0: i32, %arg1: memref<512x1024xf32, #tpu.memory_space<vmem>>, %arg2: memref<512x1024xf32, #tpu.memory_space<vmem>>, %arg3: memref<512x1024xf32, #tpu.memory_space<vmem>>) attributes {dimension_semantics = [#tpu.dimension_semantics<parallel>], iteration_bounds = array<i64: 4>, scalar_prefetch = 0 : i64, scratch_operands = 0 : i64, tpu.core_type = #tpu.core_type<tc>, window_params = [{transform_indices = @transform_0, window_bounds = array<i64: 512, 1024>}, {transform_indices = @transform_1, window_bounds = array<i64: 512, 1024>}, {transform_indices = @transform_2, window_bounds = array<i64: 512, 1024>}]} {
    %c0 = arith.constant 0 : index
    %c0_0 = arith.constant 0 : index
    %0 = vector.load %arg1[%c0, %c0_0] : memref<512x1024xf32, #tpu.memory_space<vmem>>, vector<512x1024xf32>
    %c0_1 = arith.constant 0 : index
    %c0_2 = arith.constant 0 : index
    %1 = vector.load %arg2[%c0_1, %c0_2] : memref<512x1024xf32, #tpu.memory_space<vmem>>, vector<512x1024xf32>
    %2 = arith.addf %0, %1 : vector<512x1024xf32>
    %c0_3 = arith.constant 0 : index
    %c0_4 = arith.constant 0 : index
    %3 = vector.load %arg3[%c0_3, %c0_4] : memref<512x1024xf32, #tpu.memory_space<vmem>>, vector<512x1024xf32>
    tpu.vector_store %arg3[%c0_3, %c0_4], %2 {strides = array<i32>} : memref<512x1024xf32, #tpu.memory_space<vmem>>, vector<512x1024xf32>,
    return
  }
  func.func @transform_0(%arg0: i32) -> (i32, i32) {
    %c0_i32 = arith.constant 0 : i32
    %c0_i32_0 = arith.constant 0 : i32
    return %arg0, %c0_i32 : i32, i32
  }
  func.func @transform_1(%arg0: i32) -> (i32, i32) {
    %c0_i32 = arith.constant 0 : i32
    %c0_i32_0 = arith.constant 0 : i32
    return %arg0, %c0_i32 : i32, i32
  }
  func.func @transform_2(%arg0: i32) -> (i32, i32) {
    %c0_i32 = arith.constant 0 : i32
    %c0_i32_0 = arith.constant 0 : i32
    return %arg0, %c0_i32 : i32, i32
  }
}

</mosaic_0001>

<llo_original>
// kernel: positional_encoding_add.1
$region0: #{positional_encoding_add.1}
  #allocation0 [shape = 'u32[]', space=smem, size = 0x4, offset = 0x4, fixed_abs, tag = 'smem constant byte address 0x4 - core index']
  #allocation1 [shape = 'u32[144,128]{1,0:T(1,128)}', space=vmem, size = 0x12000, scoped, tag = 'internal scratch']
  %s0 = inlined_call_operand.vmem [shape: f32[2048,1024], index: 0, kind: input, shape index: {}, may-alias: {0,2}]
  %s1 = inlined_call_operand.vmem [shape: f32[2048,1024], index: 1, kind: input, shape index: {}]
  %s2 = inlined_call_operand.vmem [shape: f32[2048,1024], index: 2, kind: output, shape index: {}, may-alias: {0,2}]
  %s3 = sld [smem:[#allocation0]]
  $region41: #{positional_encoding_add.1} parent=0
    _
  %s5 = ssub.s32 1, %s3
  %s6 = scalar_select 0, %s5, %s3
  loop: start=0, step=1, limit=6
  $region2: #{positional_encoding_add.1} parent=0 // loop_pre_header
    _
  $region3: #{positional_encoding_add.1} parent=0 // loop_header
    %s8 = sphi 0, %s12
    %p9 = scmp.ge.s32.totalorder %s8, 6
    %s18 = sphi 0, %s20
    %s21 = sphi 0, %s18
    %s22 = sphi 0, %s21
    %s38 = sphi 0, %s22
    %s44 = sphi 0, %s46
    %s47 = sphi 0, %s44
    %s48 = sphi 0, %s47
    %s64 = sphi 0, %s48
    %s70 = sphi 0, %s72
    %s73 = sphi 0, %s70
    %s74 = sphi 0, %s73
    %s90 = sphi 0, %s74
  $region4: #{positional_encoding_add.1} parent=0 // loop_header_branch
    %11 = sbr.rel (%p9) target = $region8
  $region5: #{positional_encoding_add.1} parent=0 // loop_body
    %s13 = ssub.s32 %s8, 1
    %s14 = ssub.s32 %s8, 2
    %s15 = sadd.s32 %s8, 1
    %s16 = ssub.s32 %s8, %s15
    %p17 = scmp.eq.s32.totalorder %s16, 0
    %s19 = sadd.s32 %s18, 1
    %s20 = scalar_select %p17, %s18, %s19
    %p23 = pneg %p17
    %p24 = scmp.eq.s32.totalorder %s8, 3
    %p25 = por %p23, %p24
    %p26 = scmp.ne.s32.totalorder %s18, %s21
    %p27 = scmp.eq.s32.totalorder %s8, 0
    %p28 = por %p26, %p27
    %p29 = scmp.ne.s32.totalorder %s18, %s21
    %p30 = scmp.eq.s32.totalorder %s13, 3
    %p31 = por %p29, %p30
    %p32 = scmp.ne.s32.totalorder %s21, %s22
    %p33 = scmp.eq.s32.totalorder %s13, 0
    %p34 = por %p32, %p33
    %p35 = scmp.ne.s32.totalorder %s21, %s22
    %p36 = scmp.eq.s32.totalorder %s14, 3
    %p37 = por %p35, %p36
    %p39 = scmp.ne.s32.totalorder %s22, %s38
    %p40 = scmp.eq.s32.totalorder %s14, 0
    %p41 = por %p39, %p40
    %s42 = ssub.s32 %s8, %s15
    %p43 = scmp.eq.s32.totalorder %s42, 0
    %s45 = sadd.s32 %s44, 1
    %s46 = scalar_select %p43, %s44, %s45
    %p49 = pneg %p43
    %p50 = scmp.eq.s32.totalorder %s8, 3
    %p51 = por %p49, %p50
    %p52 = scmp.ne.s32.totalorder %s44, %s47
    %p53 = scmp.eq.s32.totalorder %s8, 0
    %p54 = por %p52, %p53
    %p55 = scmp.ne.s32.totalorder %s44, %s47
    %p56 = scmp.eq.s32.totalorder %s13, 3
    %p57 = por %p55, %p56
    %p58 = scmp.ne.s32.totalorder %s47, %s48
    %p59 = scmp.eq.s32.totalorder %s13, 0
    %p60 = por %p58, %p59
    %p61 = scmp.ne.s32.totalorder %s47, %s48
    %p62 = scmp.eq.s32.totalorder %s14, 3
    %p63 = por %p61, %p62
    %p65 = scmp.ne.s32.totalorder %s48, %s64
    %p66 = scmp.eq.s32.totalorder %s14, 0
    %p67 = por %p65, %p66
    %s68 = ssub.s32 %s8, %s15
    %p69 = scmp.eq.s32.totalorder %s68, 0
    %s71 = sadd.s32 %s70, 1
    %s72 = scalar_select %p69, %s70, %s71
    %p75 = pneg %p69
    %p76 = scmp.eq.s32.totalorder %s8, 3
    %p77 = por %p75, %p76
    %p78 = scmp.ne.s32.totalorder %s70, %s73
    %p79 = scmp.eq.s32.totalorder %s8, 0
    %p80 = por %p78, %p79
    %p81 = scmp.ne.s32.totalorder %s70, %s73
    %p82 = scmp.eq.s32.totalorder %s13, 3
    %p83 = por %p81, %p82
    %p84 = scmp.ne.s32.totalorder %s73, %s74
    %p85 = scmp.eq.s32.totalorder %s13, 0
    %p86 = por %p84, %p85
    %p87 = scmp.ne.s32.totalorder %s73, %s74
    %p88 = scmp.eq.s32.totalorder %s14, 3
    %p89 = por %p87, %p88
    %p91 = scmp.ne.s32.totalorder %s74, %s90
    %p92 = scmp.eq.s32.totalorder %s14, 0
    %p93 = por %p91, %p92
    %p94 = scmp.le.s32.totalorder 1, %s8
    %p95 = scmp.lt.s32.totalorder %s8, 5
    %p96 = pnand %p94, %p95
    %p97 = pneg %p96
    // Predicated region
    $region9: #{positional_encoding_add.1} parent=5 // pred_check
      _
    $region10: #{positional_encoding_add.1} parent=5 // pred_check_branch
      %99 = sbr.rel (%p96) target = $region12
    $region11: #{positional_encoding_add.1} parent=5 // pred_region
      %s100 = ssub.s32 %s8, 1
    $region12: #{positional_encoding_add.1} parent=5 // pred_fallthru
      _
    %p101 = scmp.lt.s32.totalorder %s8, 4
    // Predicated region
    $region13: #{positional_encoding_add.1} parent=5 // pred_check
      %p102 = pneg %p101
    $region14: #{positional_encoding_add.1} parent=5 // pred_check_branch
      %104 = sbr.rel (%p102) target = $region16
    $region15: #{positional_encoding_add.1} parent=5 // pred_region
      // Predicated region
      $region17: #{positional_encoding_add.1} parent=15 // pred_check
        %p105 = pneg %p28
      $region18: #{positional_encoding_add.1} parent=15 // pred_check_branch
        %107 = sbr.rel (%p105) target = $region20
      $region19: #{positional_encoding_add.1} parent=15 // pred_region
        %s108 = smul.u32 64, %s8
        %p109 = scmp.lt.s32.totalorder %s108, 255
        %s110 = scalar_select %p109, %s108, 255
        %s111 = smul.addr %s110, 8
        %s112 = smul.addr %s111, 8
        %s113 = scalar_lea.vmem %s0, %s112
        %s114 = smul.u32 64, %s8
      $region20: #{positional_encoding_add.1} parent=15 // pred_fallthru
        _
      // Predicated region
      $region21: #{positional_encoding_add.1} parent=15 // pred_check
        %p115 = pneg %p54
      $region22: #{positional_encoding_add.1} parent=15 // pred_check_branch
        %117 = sbr.rel (%p115) target = $region24
      $region23: #{positional_encoding_add.1} parent=15 // pred_region
        %s118 = smul.u32 64, %s8
        %p119 = scmp.lt.s32.totalorder %s118, 255
        %s120 = scalar_select %p119, %s118, 255
        %s121 = smul.addr %s120, 8
        %s122 = smul.addr %s121, 8
        %s123 = scalar_lea.vmem %s1, %s122
        %s124 = smul.u32 64, %s8
      $region24: #{positional_encoding_add.1} parent=15 // pred_fallthru
        _
    $region16: #{positional_encoding_add.1} parent=5 // pred_fallthru
      _
    %p125 = scmp.le.s32.totalorder 1, %s8
    %p126 = scmp.lt.s32.totalorder %s8, 5
    %p127 = pnand %p125, %p126
    %p128 = pneg %p127
    // Predicated region
    $region25: #{positional_encoding_add.1} parent=5 // pred_check
      _
    $region26: #{positional_encoding_add.1} parent=5 // pred_check_branch
      %130 = sbr.rel (%p127) target = $region28
    $region27: #{positional_encoding_add.1} parent=5 // pred_region
      %s131 = ssub.s32 %s8, 1
      %s132 = smul.u32 64, %s13
      %p133 = scmp.lt.s32.totalorder %s132, 255
      %s134 = scalar_select %p133, %s132, 255
      %s135 = smul.addr %s134, 8
      %s136 = smul.addr %s135, 8
      %s137 = scalar_lea.vmem %s0, %s136
      %p138 = pneg %p34
      %p139 = pneg %p31
      %s140 = smul.u32 64, %s13
      %p141 = scmp.lt.s32.totalorder %s140, 255
      %s142 = scalar_select %p141, %s140, 255
      %s143 = smul.addr %s142, 8
      %s144 = smul.addr %s143, 8
      %s145 = scalar_lea.vmem %s1, %s144
      %p146 = pneg %p60
      %p147 = pneg %p57
      %p148 = pneg %p86
      %p149 = pneg %p83
      %s150 = smul.u32 64, %s13
      %p151 = scmp.lt.s32.totalorder %s150, 255
      %s152 = scalar_select %p151, %s150, 255
      %s153 = smul.addr %s152, 8
      %s154 = smul.addr %s153, 8
      %s155 = scalar_lea.vmem %s2, %s154
      %s156 = smul.u32 64, %s13
      %p157 = scmp.lt.s32.totalorder %s156, 255
      %s158 = scalar_select %p157, %s156, 255
      %s159 = smul.addr %s158, 8
      %s160 = smul.addr %s159, 8
      %s161 = scalar_lea.vmem %s0, %s160
      %s162 = smul.u32 64, %s13
      %s163 = smul.u32 64, %s13
      %p164 = scmp.lt.s32.totalorder %s163, 255
      %s165 = scalar_select %p164, %s163, 255
      %s166 = smul.addr %s165, 8
      %s167 = smul.addr %s166, 8
      %s168 = scalar_lea.vmem %s1, %s167
      %s169 = smul.u32 64, %s13
      %s170 = smul.u32 64, %s13
      %p171 = scmp.lt.s32.totalorder %s170, 255
      %s172 = scalar_select %p171, %s170, 255
      %s173 = smul.addr %s172, 8
      %s174 = smul.addr %s173, 8
      %s175 = scalar_lea.vmem %s2, %s174
      %s176 = smul.u32 64, %s13
      %v177 = vld [vmem:[%s161] sm:$0xff]
      %v178 = vld [vmem:[%s161 + $0x8] sm:$0xff]
      %v179 = vld [vmem:[%s161 + $0x10] sm:$0xff]
      %v180 = vld [vmem:[%s161 + $0x18] sm:$0xff]
      %v181 = vld [vmem:[%s161 + $0x20] sm:$0xff]
      %v182 = vld [vmem:[%s161 + $0x28] sm:$0xff]
      %v183 = vld [vmem:[%s161 + $0x30] sm:$0xff]
      %v184 = vld [vmem:[%s161 + $0x38] sm:$0xff]
      %v185 = vld [vmem:[%s161 + $0x40] sm:$0xff]
      %v186 = vld [vmem:[%s161 + $0x48] sm:$0xff]
      %v187 = vld [vmem:[%s161 + $0x50] sm:$0xff]
      %v188 = vld [vmem:[%s161 + $0x58] sm:$0xff]
      %v189 = vld [vmem:[%s161 + $0x60] sm:$0xff]
      %v190 = vld [vmem:[%s161 + $0x68] sm:$0xff]
      %v191 = vld [vmem:[%s161 + $0x70] sm:$0xff]
      %v192 = vld [vmem:[%s161 + $0x78] sm:$0xff]
      %v193 = vld [vmem:[%s161 + $0x80] sm:$0xff]
      %v194 = vld [vmem:[%s161 + $0x88] sm:$0xff]
      %v195 = vld [vmem:[%s161 + $0x90] sm:$0xff]
      %v196 = vld [vmem:[%s161 + $0x98] sm:$0xff]
      %v197 = vld [vmem:[%s161 + $0xa0] sm:$0xff]
      %v198 = vld [vmem:[%s161 + $0xa8] sm:$0xff]
      %v199 = vld [vmem:[%s161 + $0xb0] sm:$0xff]
      %v200 = vld [vmem:[%s161 + $0xb8] sm:$0xff]
      %v201 = vld [vmem:[%s161 + $0xc0] sm:$0xff]
      %v202 = vld [vmem:[%s161 + $0xc8] sm:$0xff]
      %v203 = vld [vmem:[%s161 + $0xd0] sm:$0xff]
      %v204 = vld [vmem:[%s161 + $0xd8] sm:$0xff]
      %v205 = vld [vmem:[%s161 + $0xe0] sm:$0xff]
      %v206 = vld [vmem:[%s161 + $0xe8] sm:$0xff]
      %v207 = vld [vmem:[%s161 + $0xf0] sm:$0xff]
      %v208 = vld [vmem:[%s161 + $0xf8] sm:$0xff]
      %v209 = vld [vmem:[%s161 + $0x100] sm:$0xff]
      %v210 = vld [vmem:[%s161 + $0x108] sm:$0xff]
      %v211 = vld [vmem:[%s161 + $0x110] sm:$0xff]
      %v212 = vld [vmem:[%s161 + $0x118] sm:$0xff]
      %v213 = vld [vmem:[%s161 + $0x120] sm:$0xff]
      %v214 = vld [vmem:[%s161 + $0x128] sm:$0xff]
      %v215 = vld [vmem:[%s161 + $0x130] sm:$0xff]
      %v216 = vld [vmem:[%s161 + $0x138] sm:$0xff]
      %v217 = vld [vmem:[%s161 + $0x140] sm:$0xff]
      %v218 = vld [vmem:[%s161 + $0x148] sm:$0xff]
      %v219 = vld [vmem:[%s161 + $0x150] sm:$0xff]
      %v220 = vld [vmem:[%s161 + $0x158] sm:$0xff]
      %v221 = vld [vmem:[%s161 + $0x160] sm:$0xff]
      %v222 = vld [vmem:[%s161 + $0x168] sm:$0xff]
      %v223 = vld [vmem:[%s161 + $0x170] sm:$0xff]
      %v224 = vld [vmem:[%s161 + $0x178] sm:$0xff]
      %v225 = vld [vmem:[%s161 + $0x180] sm:$0xff]
      %v226 = vld [vmem:[%s161 + $0x188] sm:$0xff]
      %v227 = vld [vmem:[%s161 + $0x190] sm:$0xff]
      %v228 = vld [vmem:[%s161 + $0x198] sm:$0xff]
      %v229 = vld [vmem:[%s161 + $0x1a0] sm:$0xff]
      %v230 = vld [vmem:[%s161 + $0x1a8] sm:$0xff]
      %v231 = vld [vmem:[%s161 + $0x1b0] sm:$0xff]
      %v232 = vld [vmem:[%s161 + $0x1b8] sm:$0xff]
      %v233 = vld [vmem:[%s161 + $0x1c0] sm:$0xff]
      %v234 = vld [vmem:[%s161 + $0x1c8] sm:$0xff]
      %v235 = vld [vmem:[%s161 + $0x1d0] sm:$0xff]
      %v236 = vld [vmem:[%s161 + $0x1d8] sm:$0xff]
      %v237 = vld [vmem:[%s161 + $0x1e0] sm:$0xff]
      %v238 = vld [vmem:[%s161 + $0x1e8] sm:$0xff]
      %v239 = vld [vmem:[%s161 + $0x1f0] sm:$0xff]
      %v240 = vld [vmem:[%s161 + $0x1f8] sm:$0xff]
      %v241 = vld [vmem:[%s161 + $0x200] sm:$0xff]
      %v242 = vld [vmem:[%s161 + $0x208] sm:$0xff]
      %v243 = vld [vmem:[%s161 + $0x210] sm:$0xff]
      %v244 = vld [vmem:[%s161 + $0x218] sm:$0xff]
      %v245 = vld [vmem:[%s161 + $0x220] sm:$0xff]
      %v246 = vld [vmem:[%s161 + $0x228] sm:$0xff]
      %v247 = vld [vmem:[%s161 + $0x230] sm:$0xff]
      %v248 = vld [vmem:[%s161 + $0x238] sm:$0xff]
      %v249 = vld [vmem:[%s161 + $0x240] sm:$0xff]
      %v250 = vld [vmem:[%s161 + $0x248] sm:$0xff]
      %v251 = vld [vmem:[%s161 + $0x250] sm:$0xff]
      %v252 = vld [vmem:[%s161 + $0x258] sm:$0xff]
      %v253 = vld [vmem:[%s161 + $0x260] sm:$0xff]
      %v254 = vld [vmem:[%s161 + $0x268] sm:$0xff]
      %v255 = vld [vmem:[%s161 + $0x270] sm:$0xff]
      %v256 = vld [vmem:[%s161 + $0x278] sm:$0xff]
      %v257 = vld [vmem:[%s161 + $0x280] sm:$0xff]
      %v258 = vld [vmem:[%s161 + $0x288] sm:$0xff]
      %v259 = vld [vmem:[%s161 + $0x290] sm:$0xff]
      %v260 = vld [vmem:[%s161 + $0x298] sm:$0xff]
      %v261 = vld [vmem:[%s161 + $0x2a0] sm:$0xff]
      %v262 = vld [vmem:[%s161 + $0x2a8] sm:$0xff]
      %v263 = vld [vmem:[%s161 + $0x2b0] sm:$0xff]
      %v264 = vld [vmem:[%s161 + $0x2b8] sm:$0xff]
      %v265 = vld [vmem:[%s161 + $0x2c0] sm:$0xff]
      %v266 = vld [vmem:[%s161 + $0x2c8] sm:$0xff]
      %v267 = vld [vmem:[%s161 + $0x2d0] sm:$0xff]
      %v268 = vld [vmem:[%s161 + $0x2d8] sm:$0xff]
      %v269 = vld [vmem:[%s161 + $0x2e0] sm:$0xff]
      %v270 = vld [vmem:[%s161 + $0x2e8] sm:$0xff]
      %v271 = vld [vmem:[%s161 + $0x2f0] sm:$0xff]
      %v272 = vld [vmem:[%s161 + $0x2f8] sm:$0xff]
      %v273 = vld [vmem:[%s161 + $0x300] sm:$0xff]
      %v274 = vld [vmem:[%s161 + $0x308] sm:$0xff]
      %v275 = vld [vmem:[%s161 + $0x310] sm:$0xff]
      %v276 = vld [vmem:[%s161 + $0x318] sm:$0xff]
      %v277 = vld [vmem:[%s161 + $0x320] sm:$0xff]
      %v278 = vld [vmem:[%s161 + $0x328] sm:$0xff]
      %v279 = vld [vmem:[%s161 + $0x330] sm:$0xff]
      %v280 = vld [vmem:[%s161 + $0x338] sm:$0xff]
      %v281 = vld [vmem:[%s161 + $0x340] sm:$0xff]
      %v282 = vld [vmem:[%s161 + $0x348] sm:$0xff]
      %v283 = vld [vmem:[%s161 + $0x350] sm:$0xff]
      %v284 = vld [vmem:[%s161 + $0x358] sm:$0xff]
      %v285 = vld [vmem:[%s161 + $0x360] sm:$0xff]
      %v286 = vld [vmem:[%s161 + $0x368] sm:$0xff]
      %v287 = vld [vmem:[%s161 + $0x370] sm:$0xff]
      %v288 = vld [vmem:[%s161 + $0x378] sm:$0xff]
      %v289 = vld [vmem:[%s161 + $0x380] sm:$0xff]
      %v290 = vld [vmem:[%s161 + $0x388] sm:$0xff]
      %v291 = vld [vmem:[%s161 + $0x390] sm:$0xff]
      %v292 = vld [vmem:[%s161 + $0x398] sm:$0xff]
      %v293 = vld [vmem:[%s161 + $0x3a0] sm:$0xff]
      %v294 = vld [vmem:[%s161 + $0x3a8] sm:$0xff]
      %v295 = vld [vmem:[%s161 + $0x3b0] sm:$0xff]
      %v296 = vld [vmem:[%s161 + $0x3b8] sm:$0xff]
      %v297 = vld [vmem:[%s161 + $0x3c0] sm:$0xff]
      %v298 = vld [vmem:[%s161 + $0x3c8] sm:$0xff]
      %v299 = vld [vmem:[%s161 + $0x3d0] sm:$0xff]
      %v300 = vld [vmem:[%s161 + $0x3d8] sm:$0xff]
      %v301 = vld [vmem:[%s161 + $0x3e0] sm:$0xff]
      %v302 = vld [vmem:[%s161 + $0x3e8] sm:$0xff]
      %v303 = vld [vmem:[%s161 + $0x3f0] sm:$0xff]
      %v304 = vld [vmem:[%s161 + $0x3f8] sm:$0xff]
      %v305 = vld [vmem:[%s161 + $0x400] sm:$0xff]
      %v306 = vld [vmem:[%s161 + $0x408] sm:$0xff]
      %v307 = vld [vmem:[%s161 + $0x410] sm:$0xff]
      %v308 = vld [vmem:[%s161 + $0x418] sm:$0xff]
      %v309 = vld [vmem:[%s161 + $0x420] sm:$0xff]
      %v310 = vld [vmem:[%s161 + $0x428] sm:$0xff]
      %v311 = vld [vmem:[%s161 + $0x430] sm:$0xff]
      %v312 = vld [vmem:[%s161 + $0x438] sm:$0xff]
      %v313 = vld [vmem:[%s161 + $0x440] sm:$0xff]
      %v314 = vld [vmem:[%s161 + $0x448] sm:$0xff]
      %v315 = vld [vmem:[%s161 + $0x450] sm:$0xff]
      %v316 = vld [vmem:[%s161 + $0x458] sm:$0xff]
      %v317 = vld [vmem:[%s161 + $0x460] sm:$0xff]
      %v318 = vld [vmem:[%s161 + $0x468] sm:$0xff]
      %v319 = vld [vmem:[%s161 + $0x470] sm:$0xff]
      %v320 = vld [vmem:[%s161 + $0x478] sm:$0xff]
      %v321 = vld [vmem:[%s161 + $0x480] sm:$0xff]
      %v322 = vld [vmem:[%s161 + $0x488] sm:$0xff]
      %v323 = vld [vmem:[%s161 + $0x490] sm:$0xff]
      %v324 = vld [vmem:[%s161 + $0x498] sm:$0xff]
      %v325 = vld [vmem:[%s161 + $0x4a0] sm:$0xff]
      %v326 = vld [vmem:[%s161 + $0x4a8] sm:$0xff]
      %v327 = vld [vmem:[%s161 + $0x4b0] sm:$0xff]
      %v328 = vld [vmem:[%s161 + $0x4b8] sm:$0xff]
      %v329 = vld [vmem:[%s161 + $0x4c0] sm:$0xff]
      %v330 = vld [vmem:[%s161 + $0x4c8] sm:$0xff]
      %v331 = vld [vmem:[%s161 + $0x4d0] sm:$0xff]
      %v332 = vld [vmem:[%s161 + $0x4d8] sm:$0xff]
      %v333 = vld [vmem:[%s161 + $0x4e0] sm:$0xff]
      %v334 = vld [vmem:[%s161 + $0x4e8] sm:$0xff]
      %v335 = vld [vmem:[%s161 + $0x4f0] sm:$0xff]
      %v336 = vld [vmem:[%s161 + $0x4f8] sm:$0xff]
      %v337 = vld [vmem:[%s161 + $0x500] sm:$0xff]
      %v338 = vld [vmem:[%s161 + $0x508] sm:$0xff]
      %v339 = vld [vmem:[%s161 + $0x510] sm:$0xff]
      %v340 = vld [vmem:[%s161 + $0x518] sm:$0xff]
      %v341 = vld [vmem:[%s161 + $0x520] sm:$0xff]
      %v342 = vld [vmem:[%s161 + $0x528] sm:$0xff]
      %v343 = vld [vmem:[%s161 + $0x530] sm:$0xff]
      %v344 = vld [vmem:[%s161 + $0x538] sm:$0xff]
      %v345 = vld [vmem:[%s161 + $0x540] sm:$0xff]
      %v346 = vld [vmem:[%s161 + $0x548] sm:$0xff]
      %v347 = vld [vmem:[%s161 + $0x550] sm:$0xff]
      %v348 = vld [vmem:[%s161 + $0x558] sm:$0xff]
      %v349 = vld [vmem:[%s161 + $0x560] sm:$0xff]
      %v350 = vld [vmem:[%s161 + $0x568] sm:$0xff]
      %v351 = vld [vmem:[%s161 + $0x570] sm:$0xff]
      %v352 = vld [vmem:[%s161 + $0x578] sm:$0xff]
      %v353 = vld [vmem:[%s161 + $0x580] sm:$0xff]
      %v354 = vld [vmem:[%s161 + $0x588] sm:$0xff]
      %v355 = vld [vmem:[%s161 + $0x590] sm:$0xff]
      %v356 = vld [vmem:[%s161 + $0x598] sm:$0xff]
      %v357 = vld [vmem:[%s161 + $0x5a0] sm:$0xff]
      %v358 = vld [vmem:[%s161 + $0x5a8] sm:$0xff]
      %v359 = vld [vmem:[%s161 + $0x5b0] sm:$0xff]
      %v360 = vld [vmem:[%s161 + $0x5b8] sm:$0xff]
      %v361 = vld [vmem:[%s161 + $0x5c0] sm:$0xff]
      %v362 = vld [vmem:[%s161 + $0x5c8] sm:$0xff]
      %v363 = vld [vmem:[%s161 + $0x5d0] sm:$0xff]
      %v364 = vld [vmem:[%s161 + $0x5d8] sm:$0xff]
      %v365 = vld [vmem:[%s161 + $0x5e0] sm:$0xff]
      %v366 = vld [vmem:[%s161 + $0x5e8] sm:$0xff]
      %v367 = vld [vmem:[%s161 + $0x5f0] sm:$0xff]
      %v368 = vld [vmem:[%s161 + $0x5f8] sm:$0xff]
      %v369 = vld [vmem:[%s161 + $0x600] sm:$0xff]
      %v370 = vld [vmem:[%s161 + $0x608] sm:$0xff]
      %v371 = vld [vmem:[%s161 + $0x610] sm:$0xff]
      %v372 = vld [vmem:[%s161 + $0x618] sm:$0xff]
      %v373 = vld [vmem:[%s161 + $0x620] sm:$0xff]
      %v374 = vld [vmem:[%s161 + $0x628] sm:$0xff]
      %v375 = vld [vmem:[%s161 + $0x630] sm:$0xff]
      %v376 = vld [vmem:[%s161 + $0x638] sm:$0xff]
      %v377 = vld [vmem:[%s161 + $0x640] sm:$0xff]
      %v378 = vld [vmem:[%s161 + $0x648] sm:$0xff]
      %v379 = vld [vmem:[%s161 + $0x650] sm:$0xff]
      %v380 = vld [vmem:[%s161 + $0x658] sm:$0xff]
      %v381 = vld [vmem:[%s161 + $0x660] sm:$0xff]
      %v382 = vld [vmem:[%s161 + $0x668] sm:$0xff]
      %v383 = vld [vmem:[%s161 + $0x670] sm:$0xff]
      %v384 = vld [vmem:[%s161 + $0x678] sm:$0xff]
      %v385 = vld [vmem:[%s161 + $0x680] sm:$0xff]
      %v386 = vld [vmem:[%s161 + $0x688] sm:$0xff]
      %v387 = vld [vmem:[%s161 + $0x690] sm:$0xff]
      %v388 = vld [vmem:[%s161 + $0x698] sm:$0xff]
      %v389 = vld [vmem:[%s161 + $0x6a0] sm:$0xff]
      %v390 = vld [vmem:[%s161 + $0x6a8] sm:$0xff]
      %v391 = vld [vmem:[%s161 + $0x6b0] sm:$0xff]
      %v392 = vld [vmem:[%s161 + $0x6b8] sm:$0xff]
      %v393 = vld [vmem:[%s161 + $0x6c0] sm:$0xff]
      %v394 = vld [vmem:[%s161 + $0x6c8] sm:$0xff]
      %v395 = vld [vmem:[%s161 + $0x6d0] sm:$0xff]
      %v396 = vld [vmem:[%s161 + $0x6d8] sm:$0xff]
      %v397 = vld [vmem:[%s161 + $0x6e0] sm:$0xff]
      %v398 = vld [vmem:[%s161 + $0x6e8] sm:$0xff]
      %v399 = vld [vmem:[%s161 + $0x6f0] sm:$0xff]
      %v400 = vld [vmem:[%s161 + $0x6f8] sm:$0xff]
      %v401 = vld [vmem:[%s161 + $0x700] sm:$0xff]
      %v402 = vld [vmem:[%s161 + $0x708] sm:$0xff]
      %v403 = vld [vmem:[%s161 + $0x710] sm:$0xff]
      %v404 = vld [vmem:[%s161 + $0x718] sm:$0xff]
      %v405 = vld [vmem:[%s161 + $0x720] sm:$0xff]
      %v406 = vld [vmem:[%s161 + $0x728] sm:$0xff]
      %v407 = vld [vmem:[%s161 + $0x730] sm:$0xff]
      %v408 = vld [vmem:[%s161 + $0x738] sm:$0xff]
      %v409 = vld [vmem:[%s161 + $0x740] sm:$0xff]
      %v410 = vld [vmem:[%s161 + $0x748] sm:$0xff]
      %v411 = vld [vmem:[%s161 + $0x750] sm:$0xff]
      %v412 = vld [vmem:[%s161 + $0x758] sm:$0xff]
      %v413 = vld [vmem:[%s161 + $0x760] sm:$0xff]
      %v414 = vld [vmem:[%s161 + $0x768] sm:$0xff]
      %v415 = vld [vmem:[%s161 + $0x770] sm:$0xff]
      %v416 = vld [vmem:[%s161 + $0x778] sm:$0xff]
      %v417 = vld [vmem:[%s161 + $0x780] sm:$0xff]
      %v418 = vld [vmem:[%s161 + $0x788] sm:$0xff]
      %v419 = vld [vmem:[%s161 + $0x790] sm:$0xff]
      %v420 = vld [vmem:[%s161 + $0x798] sm:$0xff]
      %v421 = vld [vmem:[%s161 + $0x7a0] sm:$0xff]
      %v422 = vld [vmem:[%s161 + $0x7a8] sm:$0xff]
      %v423 = vld [vmem:[%s161 + $0x7b0] sm:$0xff]
      %v424 = vld [vmem:[%s161 + $0x7b8] sm:$0xff]
      %v425 = vld [vmem:[%s161 + $0x7c0] sm:$0xff]
      %v426 = vld [vmem:[%s161 + $0x7c8] sm:$0xff]
      %v427 = vld [vmem:[%s161 + $0x7d0] sm:$0xff]
      %v428 = vld [vmem:[%s161 + $0x7d8] sm:$0xff]
      %v429 = vld [vmem:[%s161 + $0x7e0] sm:$0xff]
      %v430 = vld [vmem:[%s161 + $0x7e8] sm:$0xff]
      %v431 = vld [vmem:[%s161 + $0x7f0] sm:$0xff]
      %v432 = vld [vmem:[%s161 + $0x7f8] sm:$0xff]
      %v433 = vld [vmem:[%s161 + $0x800] sm:$0xff]
      %v434 = vld [vmem:[%s161 + $0x808] sm:$0xff]
      %v435 = vld [vmem:[%s161 + $0x810] sm:$0xff]
      %v436 = vld [vmem:[%s161 + $0x818] sm:$0xff]
      %v437 = vld [vmem:[%s161 + $0x820] sm:$0xff]
      %v438 = vld [vmem:[%s161 + $0x828] sm:$0xff]
      %v439 = vld [vmem:[%s161 + $0x830] sm:$0xff]
      %v440 = vld [vmem:[%s161 + $0x838] sm:$0xff]
      %v441 = vld [vmem:[%s161 + $0x840] sm:$0xff]
      %v442 = vld [vmem:[%s161 + $0x848] sm:$0xff]
      %v443 = vld [vmem:[%s161 + $0x850] sm:$0xff]
      %v444 = vld [vmem:[%s161 + $0x858] sm:$0xff]
      %v445 = vld [vmem:[%s161 + $0x860] sm:$0xff]
      %v446 = vld [vmem:[%s161 + $0x868] sm:$0xff]
      %v447 = vld [vmem:[%s161 + $0x870] sm:$0xff]
      %v448 = vld [vmem:[%s161 + $0x878] sm:$0xff]
      %v449 = vld [vmem:[%s161 + $0x880] sm:$0xff]
      %v450 = vld [vmem:[%s161 + $0x888] sm:$0xff]
      %v451 = vld [vmem:[%s161 + $0x890] sm:$0xff]
      %v452 = vld [vmem:[%s161 + $0x898] sm:$0xff]
      %v453 = vld [vmem:[%s161 + $0x8a0] sm:$0xff]
      %v454 = vld [vmem:[%s161 + $0x8a8] sm:$0xff]
      %v455 = vld [vmem:[%s161 + $0x8b0] sm:$0xff]
      %v456 = vld [vmem:[%s161 + $0x8b8] sm:$0xff]
      %v457 = vld [vmem:[%s161 + $0x8c0] sm:$0xff]
      %v458 = vld [vmem:[%s161 + $0x8c8] sm:$0xff]
      %v459 = vld [vmem:[%s161 + $0x8d0] sm:$0xff]
      %v460 = vld [vmem:[%s161 + $0x8d8] sm:$0xff]
      %v461 = vld [vmem:[%s161 + $0x8e0] sm:$0xff]
      %v462 = vld [vmem:[%s161 + $0x8e8] sm:$0xff]
      %v463 = vld [vmem:[%s161 + $0x8f0] sm:$0xff]
      %v464 = vld [vmem:[%s161 + $0x8f8] sm:$0xff]
      %v465 = vld [vmem:[%s161 + $0x900] sm:$0xff]
      %v466 = vld [vmem:[%s161 + $0x908] sm:$0xff]
      %v467 = vld [vmem:[%s161 + $0x910] sm:$0xff]
      %v468 = vld [vmem:[%s161 + $0x918] sm:$0xff]
      %v469 = vld [vmem:[%s161 + $0x920] sm:$0xff]
      %v470 = vld [vmem:[%s161 + $0x928] sm:$0xff]
      %v471 = vld [vmem:[%s161 + $0x930] sm:$0xff]
      %v472 = vld [vmem:[%s161 + $0x938] sm:$0xff]
      %v473 = vld [vmem:[%s161 + $0x940] sm:$0xff]
      %v474 = vld [vmem:[%s161 + $0x948] sm:$0xff]
      %v475 = vld [vmem:[%s161 + $0x950] sm:$0xff]
      %v476 = vld [vmem:[%s161 + $0x958] sm:$0xff]
      %v477 = vld [vmem:[%s161 + $0x960] sm:$0xff]
      %v478 = vld [vmem:[%s161 + $0x968] sm:$0xff]
      %v479 = vld [vmem:[%s161 + $0x970] sm:$0xff]
      %v480 = vld [vmem:[%s161 + $0x978] sm:$0xff]
      %v481 = vld [vmem:[%s161 + $0x980] sm:$0xff]
      %v482 = vld [vmem:[%s161 + $0x988] sm:$0xff]
      %v483 = vld [vmem:[%s161 + $0x990] sm:$0xff]
      %v484 = vld [vmem:[%s161 + $0x998] sm:$0xff]
      %v485 = vld [vmem:[%s161 + $0x9a0] sm:$0xff]
      %v486 = vld [vmem:[%s161 + $0x9a8] sm:$0xff]
      %v487 = vld [vmem:[%s161 + $0x9b0] sm:$0xff]
      %v488 = vld [vmem:[%s161 + $0x9b8] sm:$0xff]
      %v489 = vld [vmem:[%s161 + $0x9c0] sm:$0xff]
      %v490 = vld [vmem:[%s161 + $0x9c8] sm:$0xff]
      %v491 = vld [vmem:[%s161 + $0x9d0] sm:$0xff]
      %v492 = vld [vmem:[%s161 + $0x9d8] sm:$0xff]
      %v493 = vld [vmem:[%s161 + $0x9e0] sm:$0xff]
      %v494 = vld [vmem:[%s161 + $0x9e8] sm:$0xff]
      %v495 = vld [vmem:[%s161 + $0x9f0] sm:$0xff]
      %v496 = vld [vmem:[%s161 + $0x9f8] sm:$0xff]
      %v497 = vld [vmem:[%s161 + $0xa00] sm:$0xff]
      %v498 = vld [vmem:[%s161 + $0xa08] sm:$0xff]
      %v499 = vld [vmem:[%s161 + $0xa10] sm:$0xff]
      %v500 = vld [vmem:[%s161 + $0xa18] sm:$0xff]
      %v501 = vld [vmem:[%s161 + $0xa20] sm:$0xff]
      %v502 = vld [vmem:[%s161 + $0xa28] sm:$0xff]
      %v503 = vld [vmem:[%s161 + $0xa30] sm:$0xff]
      %v504 = vld [vmem:[%s161 + $0xa38] sm:$0xff]
      %v505 = vld [vmem:[%s161 + $0xa40] sm:$0xff]
      %v506 = vld [vmem:[%s161 + $0xa48] sm:$0xff]
      %v507 = vld [vmem:[%s161 + $0xa50] sm:$0xff]
      %v508 = vld [vmem:[%s161 + $0xa58] sm:$0xff]
      %v509 = vld [vmem:[%s161 + $0xa60] sm:$0xff]
      %v510 = vld [vmem:[%s161 + $0xa68] sm:$0xff]
      %v511 = vld [vmem:[%s161 + $0xa70] sm:$0xff]
      %v512 = vld [vmem:[%s161 + $0xa78] sm:$0xff]
      %v513 = vld [vmem:[%s161 + $0xa80] sm:$0xff]
      %v514 = vld [vmem:[%s161 + $0xa88] sm:$0xff]
      %v515 = vld [vmem:[%s161 + $0xa90] sm:$0xff]
      %v516 = vld [vmem:[%s161 + $0xa98] sm:$0xff]
      %v517 = vld [vmem:[%s161 + $0xaa0] sm:$0xff]
      %v518 = vld [vmem:[%s161 + $0xaa8] sm:$0xff]
      %v519 = vld [vmem:[%s161 + $0xab0] sm:$0xff]
      %v520 = vld [vmem:[%s161 + $0xab8] sm:$0xff]
      %v521 = vld [vmem:[%s161 + $0xac0] sm:$0xff]
      %v522 = vld [vmem:[%s161 + $0xac8] sm:$0xff]
      %v523 = vld [vmem:[%s161 + $0xad0] sm:$0xff]
      %v524 = vld [vmem:[%s161 + $0xad8] sm:$0xff]
      %v525 = vld [vmem:[%s161 + $0xae0] sm:$0xff]
      %v526 = vld [vmem:[%s161 + $0xae8] sm:$0xff]
      %v527 = vld [vmem:[%s161 + $0xaf0] sm:$0xff]
      %v528 = vld [vmem:[%s161 + $0xaf8] sm:$0xff]
      %v529 = vld [vmem:[%s161 + $0xb00] sm:$0xff]
      %v530 = vld [vmem:[%s161 + $0xb08] sm:$0xff]
      %v531 = vld [vmem:[%s161 + $0xb10] sm:$0xff]
      %v532 = vld [vmem:[%s161 + $0xb18] sm:$0xff]
      %v533 = vld [vmem:[%s161 + $0xb20] sm:$0xff]
      %v534 = vld [vmem:[%s161 + $0xb28] sm:$0xff]
      %v535 = vld [vmem:[%s161 + $0xb30] sm:$0xff]
      %v536 = vld [vmem:[%s161 + $0xb38] sm:$0xff]
      %v537 = vld [vmem:[%s161 + $0xb40] sm:$0xff]
      %v538 = vld [vmem:[%s161 + $0xb48] sm:$0xff]
      %v539 = vld [vmem:[%s161 + $0xb50] sm:$0xff]
      %v540 = vld [vmem:[%s161 + $0xb58] sm:$0xff]
      %v541 = vld [vmem:[%s161 + $0xb60] sm:$0xff]
      %v542 = vld [vmem:[%s161 + $0xb68] sm:$0xff]
      %v543 = vld [vmem:[%s161 + $0xb70] sm:$0xff]
      %v544 = vld [vmem:[%s161 + $0xb78] sm:$0xff]
      %v545 = vld [vmem:[%s161 + $0xb80] sm:$0xff]
      %v546 = vld [vmem:[%s161 + $0xb88] sm:$0xff]
      %v547 = vld [vmem:[%s161 + $0xb90] sm:$0xff]
      %v548 = vld [vmem:[%s161 + $0xb98] sm:$0xff]
      %v549 = vld [vmem:[%s161 + $0xba0] sm:$0xff]
      %v550 = vld [vmem:[%s161 + $0xba8] sm:$0xff]
      %v551 = vld [vmem:[%s161 + $0xbb0] sm:$0xff]
      %v552 = vld [vmem:[%s161 + $0xbb8] sm:$0xff]
      %v553 = vld [vmem:[%s161 + $0xbc0] sm:$0xff]
      %v554 = vld [vmem:[%s161 + $0xbc8] sm:$0xff]
      %v555 = vld [vmem:[%s161 + $0xbd0] sm:$0xff]
      %v556 = vld [vmem:[%s161 + $0xbd8] sm:$0xff]
      %v557 = vld [vmem:[%s161 + $0xbe0] sm:$0xff]
      %v558 = vld [vmem:[%s161 + $0xbe8] sm:$0xff]
      %v559 = vld [vmem:[%s161 + $0xbf0] sm:$0xff]
      %v560 = vld [vmem:[%s161 + $0xbf8] sm:$0xff]
      %v561 = vld [vmem:[%s161 + $0xc00] sm:$0xff]
      %v562 = vld [vmem:[%s161 + $0xc08] sm:$0xff]
      %v563 = vld [vmem:[%s161 + $0xc10] sm:$0xff]
      %v564 = vld [vmem:[%s161 + $0xc18] sm:$0xff]
      %v565 = vld [vmem:[%s161 + $0xc20] sm:$0xff]
      %v566 = vld [vmem:[%s161 + $0xc28] sm:$0xff]
      %v567 = vld [vmem:[%s161 + $0xc30] sm:$0xff]
      %v568 = vld [vmem:[%s161 + $0xc38] sm:$0xff]
      %v569 = vld [vmem:[%s161 + $0xc40] sm:$0xff]
      %v570 = vld [vmem:[%s161 + $0xc48] sm:$0xff]
      %v571 = vld [vmem:[%s161 + $0xc50] sm:$0xff]
      %v572 = vld [vmem:[%s161 + $0xc58] sm:$0xff]
      %v573 = vld [vmem:[%s161 + $0xc60] sm:$0xff]
      %v574 = vld [vmem:[%s161 + $0xc68] sm:$0xff]
      %v575 = vld [vmem:[%s161 + $0xc70] sm:$0xff]
      %v576 = vld [vmem:[%s161 + $0xc78] sm:$0xff]
      %v577 = vld [vmem:[%s161 + $0xc80] sm:$0xff]
      %v578 = vld [vmem:[%s161 + $0xc88] sm:$0xff]
      %v579 = vld [vmem:[%s161 + $0xc90] sm:$0xff]
      %v580 = vld [vmem:[%s161 + $0xc98] sm:$0xff]
      %v581 = vld [vmem:[%s161 + $0xca0] sm:$0xff]
      %v582 = vld [vmem:[%s161 + $0xca8] sm:$0xff]
      %v583 = vld [vmem:[%s161 + $0xcb0] sm:$0xff]
      %v584 = vld [vmem:[%s161 + $0xcb8] sm:$0xff]
      %v585 = vld [vmem:[%s161 + $0xcc0] sm:$0xff]
      %v586 = vld [vmem:[%s161 + $0xcc8] sm:$0xff]
      %v587 = vld [vmem:[%s161 + $0xcd0] sm:$0xff]
      %v588 = vld [vmem:[%s161 + $0xcd8] sm:$0xff]
      %v589 = vld [vmem:[%s161 + $0xce0] sm:$0xff]
      %v590 = vld [vmem:[%s161 + $0xce8] sm:$0xff]
      %v591 = vld [vmem:[%s161 + $0xcf0] sm:$0xff]
      %v592 = vld [vmem:[%s161 + $0xcf8] sm:$0xff]
      %v593 = vld [vmem:[%s161 + $0xd00] sm:$0xff]
      %v594 = vld [vmem:[%s161 + $0xd08] sm:$0xff]
      %v595 = vld [vmem:[%s161 + $0xd10] sm:$0xff]
      %v596 = vld [vmem:[%s161 + $0xd18] sm:$0xff]
      %v597 = vld [vmem:[%s161 + $0xd20] sm:$0xff]
      %v598 = vld [vmem:[%s161 + $0xd28] sm:$0xff]
      %v599 = vld [vmem:[%s161 + $0xd30] sm:$0xff]
      %v600 = vld [vmem:[%s161 + $0xd38] sm:$0xff]
      %v601 = vld [vmem:[%s161 + $0xd40] sm:$0xff]
      %v602 = vld [vmem:[%s161 + $0xd48] sm:$0xff]
      %v603 = vld [vmem:[%s161 + $0xd50] sm:$0xff]
      %v604 = vld [vmem:[%s161 + $0xd58] sm:$0xff]
      %v605 = vld [vmem:[%s161 + $0xd60] sm:$0xff]
      %v606 = vld [vmem:[%s161 + $0xd68] sm:$0xff]
      %v607 = vld [vmem:[%s161 + $0xd70] sm:$0xff]
      %v608 = vld [vmem:[%s161 + $0xd78] sm:$0xff]
      %v609 = vld [vmem:[%s161 + $0xd80] sm:$0xff]
      %v610 = vld [vmem:[%s161 + $0xd88] sm:$0xff]
      %v611 = vld [vmem:[%s161 + $0xd90] sm:$0xff]
      %v612 = vld [vmem:[%s161 + $0xd98] sm:$0xff]
      %v613 = vld [vmem:[%s161 + $0xda0] sm:$0xff]
      %v614 = vld [vmem:[%s161 + $0xda8] sm:$0xff]
      %v615 = vld [vmem:[%s161 + $0xdb0] sm:$0xff]
      %v616 = vld [vmem:[%s161 + $0xdb8] sm:$0xff]
      %v617 = vld [vmem:[%s161 + $0xdc0] sm:$0xff]
      %v618 = vld [vmem:[%s161 + $0xdc8] sm:$0xff]
      %v619 = vld [vmem:[%s161 + $0xdd0] sm:$0xff]
      %v620 = vld [vmem:[%s161 + $0xdd8] sm:$0xff]
      %v621 = vld [vmem:[%s161 + $0xde0] sm:$0xff]
      %v622 = vld [vmem:[%s161 + $0xde8] sm:$0xff]
      %v623 = vld [vmem:[%s161 + $0xdf0] sm:$0xff]
      %v624 = vld [vmem:[%s161 + $0xdf8] sm:$0xff]
      %v625 = vld [vmem:[%s161 + $0xe00] sm:$0xff]
      %v626 = vld [vmem:[%s161 + $0xe08] sm:$0xff]
      %v627 = vld [vmem:[%s161 + $0xe10] sm:$0xff]
      %v628 = vld [vmem:[%s161 + $0xe18] sm:$0xff]
      %v629 = vld [vmem:[%s161 + $0xe20] sm:$0xff]
      %v630 = vld [vmem:[%s161 + $0xe28] sm:$0xff]
      %v631 = vld [vmem:[%s161 + $0xe30] sm:$0xff]
      %v632 = vld [vmem:[%s161 + $0xe38] sm:$0xff]
      %v633 = vld [vmem:[%s161 + $0xe40] sm:$0xff]
      %v634 = vld [vmem:[%s161 + $0xe48] sm:$0xff]
      %v635 = vld [vmem:[%s161 + $0xe50] sm:$0xff]
      %v636 = vld [vmem:[%s161 + $0xe58] sm:$0xff]
      %v637 = vld [vmem:[%s161 + $0xe60] sm:$0xff]
      %v638 = vld [vmem:[%s161 + $0xe68] sm:$0xff]
      %v639 = vld [vmem:[%s161 + $0xe70] sm:$0xff]
      %v640 = vld [vmem:[%s161 + $0xe78] sm:$0xff]
      %v641 = vld [vmem:[%s161 + $0xe80] sm:$0xff]
      %v642 = vld [vmem:[%s161 + $0xe88] sm:$0xff]
      %v643 = vld [vmem:[%s161 + $0xe90] sm:$0xff]
      %v644 = vld [vmem:[%s161 + $0xe98] sm:$0xff]
      %v645 = vld [vmem:[%s161 + $0xea0] sm:$0xff]
      %v646 = vld [vmem:[%s161 + $0xea8] sm:$0xff]
      %v647 = vld [vmem:[%s161 + $0xeb0] sm:$0xff]
      %v648 = vld [vmem:[%s161 + $0xeb8] sm:$0xff]
      %v649 = vld [vmem:[%s161 + $0xec0] sm:$0xff]
      %v650 = vld [vmem:[%s161 + $0xec8] sm:$0xff]
      %v651 = vld [vmem:[%s161 + $0xed0] sm:$0xff]
      %v652 = vld [vmem:[%s161 + $0xed8] sm:$0xff]
      %v653 = vld [vmem:[%s161 + $0xee0] sm:$0xff]
      %v654 = vld [vmem:[%s161 + $0xee8] sm:$0xff]
      %v655 = vld [vmem:[%s161 + $0xef0] sm:$0xff]
      %v656 = vld [vmem:[%s161 + $0xef8] sm:$0xff]
      %v657 = vld [vmem:[%s161 + $0xf00] sm:$0xff]
      %v658 = vld [vmem:[%s161 + $0xf08] sm:$0xff]
      %v659 = vld [vmem:[%s161 + $0xf10] sm:$0xff]
      %v660 = vld [vmem:[%s161 + $0xf18] sm:$0xff]
      %v661 = vld [vmem:[%s161 + $0xf20] sm:$0xff]
      %v662 = vld [vmem:[%s161 + $0xf28] sm:$0xff]
      %v663 = vld [vmem:[%s161 + $0xf30] sm:$0xff]
      %v664 = vld [vmem:[%s161 + $0xf38] sm:$0xff]
      %v665 = vld [vmem:[%s161 + $0xf40] sm:$0xff]
      %v666 = vld [vmem:[%s161 + $0xf48] sm:$0xff]
      %v667 = vld [vmem:[%s161 + $0xf50] sm:$0xff]
      %v668 = vld [vmem:[%s161 + $0xf58] sm:$0xff]
      %v669 = vld [vmem:[%s161 + $0xf60] sm:$0xff]
      %v670 = vld [vmem:[%s161 + $0xf68] sm:$0xff]
      %v671 = vld [vmem:[%s161 + $0xf70] sm:$0xff]
      %v672 = vld [vmem:[%s161 + $0xf78] sm:$0xff]
      %v673 = vld [vmem:[%s161 + $0xf80] sm:$0xff]
      %v674 = vld [vmem:[%s161 + $0xf88] sm:$0xff]
      %v675 = vld [vmem:[%s161 + $0xf90] sm:$0xff]
      %v676 = vld [vmem:[%s161 + $0xf98] sm:$0xff]
      %v677 = vld [vmem:[%s161 + $0xfa0] sm:$0xff]
      %v678 = vld [vmem:[%s161 + $0xfa8] sm:$0xff]
      %v679 = vld [vmem:[%s161 + $0xfb0] sm:$0xff]
      %v680 = vld [vmem:[%s161 + $0xfb8] sm:$0xff]
      %v681 = vld [vmem:[%s161 + $0xfc0] sm:$0xff]
      %v682 = vld [vmem:[%s161 + $0xfc8] sm:$0xff]
      %v683 = vld [vmem:[%s161 + $0xfd0] sm:$0xff]
      %v684 = vld [vmem:[%s161 + $0xfd8] sm:$0xff]
      %v685 = vld [vmem:[%s161 + $0xfe0] sm:$0xff]
      %v686 = vld [vmem:[%s161 + $0xfe8] sm:$0xff]
      %v687 = vld [vmem:[%s161 + $0xff0] sm:$0xff]
      %v688 = vld [vmem:[%s161 + $0xff8] sm:$0xff]
      %v689 = vld [vmem:[%s168] sm:$0xff]
      %v690 = vld [vmem:[%s168 + $0x8] sm:$0xff]
      %v691 = vld [vmem:[%s168 + $0x10] sm:$0xff]
      %v692 = vld [vmem:[%s168 + $0x18] sm:$0xff]
      %v693 = vld [vmem:[%s168 + $0x20] sm:$0xff]
      %v694 = vld [vmem:[%s168 + $0x28] sm:$0xff]
      %v695 = vld [vmem:[%s168 + $0x30] sm:$0xff]
      %v696 = vld [vmem:[%s168 + $0x38] sm:$0xff]
      %v697 = vld [vmem:[%s168 + $0x40] sm:$0xff]
      %v698 = vld [vmem:[%s168 + $0x48] sm:$0xff]
      %v699 = vld [vmem:[%s168 + $0x50] sm:$0xff]
      %v700 = vld [vmem:[%s168 + $0x58] sm:$0xff]
      %v701 = vld [vmem:[%s168 + $0x60] sm:$0xff]
      %v702 = vld [vmem:[%s168 + $0x68] sm:$0xff]
      %v703 = vld [vmem:[%s168 + $0x70] sm:$0xff]
      %v704 = vld [vmem:[%s168 + $0x78] sm:$0xff]
      %v705 = vld [vmem:[%s168 + $0x80] sm:$0xff]
      %v706 = vld [vmem:[%s168 + $0x88] sm:$0xff]
      %v707 = vld [vmem:[%s168 + $0x90] sm:$0xff]
      %v708 = vld [vmem:[%s168 + $0x98] sm:$0xff]
      %v709 = vld [vmem:[%s168 + $0xa0] sm:$0xff]
      %v710 = vld [vmem:[%s168 + $0xa8] sm:$0xff]
      %v711 = vld [vmem:[%s168 + $0xb0] sm:$0xff]
      %v712 = vld [vmem:[%s168 + $0xb8] sm:$0xff]
      %v713 = vld [vmem:[%s168 + $0xc0] sm:$0xff]
      %v714 = vld [vmem:[%s168 + $0xc8] sm:$0xff]
      %v715 = vld [vmem:[%s168 + $0xd0] sm:$0xff]
      %v716 = vld [vmem:[%s168 + $0xd8] sm:$0xff]
      %v717 = vld [vmem:[%s168 + $0xe0] sm:$0xff]
      %v718 = vld [vmem:[%s168 + $0xe8] sm:$0xff]
      %v719 = vld [vmem:[%s168 + $0xf0] sm:$0xff]
      %v720 = vld [vmem:[%s168 + $0xf8] sm:$0xff]
      %v721 = vld [vmem:[%s168 + $0x100] sm:$0xff]
      %v722 = vld [vmem:[%s168 + $0x108] sm:$0xff]
      %v723 = vld [vmem:[%s168 + $0x110] sm:$0xff]
      %v724 = vld [vmem:[%s168 + $0x118] sm:$0xff]
      %v725 = vld [vmem:[%s168 + $0x120] sm:$0xff]
      %v726 = vld [vmem:[%s168 + $0x128] sm:$0xff]
      %v727 = vld [vmem:[%s168 + $0x130] sm:$0xff]
      %v728 = vld [vmem:[%s168 + $0x138] sm:$0xff]
      %v729 = vld [vmem:[%s168 + $0x140] sm:$0xff]
      %v730 = vld [vmem:[%s168 + $0x148] sm:$0xff]
      %v731 = vld [vmem:[%s168 + $0x150] sm:$0xff]
      %v732 = vld [vmem:[%s168 + $0x158] sm:$0xff]
      %v733 = vld [vmem:[%s168 + $0x160] sm:$0xff]
      %v734 = vld [vmem:[%s168 + $0x168] sm:$0xff]
      %v735 = vld [vmem:[%s168 + $0x170] sm:$0xff]
      %v736 = vld [vmem:[%s168 + $0x178] sm:$0xff]
      %v737 = vld [vmem:[%s168 + $0x180] sm:$0xff]
      %v738 = vld [vmem:[%s168 + $0x188] sm:$0xff]
      %v739 = vld [vmem:[%s168 + $0x190] sm:$0xff]
      %v740 = vld [vmem:[%s168 + $0x198] sm:$0xff]
      %v741 = vld [vmem:[%s168 + $0x1a0] sm:$0xff]
      %v742 = vld [vmem:[%s168 + $0x1a8] sm:$0xff]
      %v743 = vld [vmem:[%s168 + $0x1b0] sm:$0xff]
      %v744 = vld [vmem:[%s168 + $0x1b8] sm:$0xff]
      %v745 = vld [vmem:[%s168 + $0x1c0] sm:$0xff]
      %v746 = vld [vmem:[%s168 + $0x1c8] sm:$0xff]
      %v747 = vld [vmem:[%s168 + $0x1d0] sm:$0xff]
      %v748 = vld [vmem:[%s168 + $0x1d8] sm:$0xff]
      %v749 = vld [vmem:[%s168 + $0x1e0] sm:$0xff]
      %v750 = vld [vmem:[%s168 + $0x1e8] sm:$0xff]
      %v751 = vld [vmem:[%s168 + $0x1f0] sm:$0xff]
      %v752 = vld [vmem:[%s168 + $0x1f8] sm:$0xff]
      %v753 = vld [vmem:[%s168 + $0x200] sm:$0xff]
      %v754 = vld [vmem:[%s168 + $0x208] sm:$0xff]
      %v755 = vld [vmem:[%s168 + $0x210] sm:$0xff]
      %v756 = vld [vmem:[%s168 + $0x218] sm:$0xff]
      %v757 = vld [vmem:[%s168 + $0x220] sm:$0xff]
      %v758 = vld [vmem:[%s168 + $0x228] sm:$0xff]
      %v759 = vld [vmem:[%s168 + $0x230] sm:$0xff]
      %v760 = vld [vmem:[%s168 + $0x238] sm:$0xff]
      %v761 = vld [vmem:[%s168 + $0x240] sm:$0xff]
      %v762 = vld [vmem:[%s168 + $0x248] sm:$0xff]
      %v763 = vld [vmem:[%s168 + $0x250] sm:$0xff]
      %v764 = vld [vmem:[%s168 + $0x258] sm:$0xff]
      %v765 = vld [vmem:[%s168 + $0x260] sm:$0xff]
      %v766 = vld [vmem:[%s168 + $0x268] sm:$0xff]
      %v767 = vld [vmem:[%s168 + $0x270] sm:$0xff]
      %v768 = vld [vmem:[%s168 + $0x278] sm:$0xff]
      %v769 = vld [vmem:[%s168 + $0x280] sm:$0xff]
      %v770 = vld [vmem:[%s168 + $0x288] sm:$0xff]
      %v771 = vld [vmem:[%s168 + $0x290] sm:$0xff]
      %v772 = vld [vmem:[%s168 + $0x298] sm:$0xff]
      %v773 = vld [vmem:[%s168 + $0x2a0] sm:$0xff]
      %v774 = vld [vmem:[%s168 + $0x2a8] sm:$0xff]
      %v775 = vld [vmem:[%s168 + $0x2b0] sm:$0xff]
      %v776 = vld [vmem:[%s168 + $0x2b8] sm:$0xff]
      %v777 = vld [vmem:[%s168 + $0x2c0] sm:$0xff]
      %v778 = vld [vmem:[%s168 + $0x2c8] sm:$0xff]
      %v779 = vld [vmem:[%s168 + $0x2d0] sm:$0xff]
      %v780 = vld [vmem:[%s168 + $0x2d8] sm:$0xff]
      %v781 = vld [vmem:[%s168 + $0x2e0] sm:$0xff]
      %v782 = vld [vmem:[%s168 + $0x2e8] sm:$0xff]
      %v783 = vld [vmem:[%s168 + $0x2f0] sm:$0xff]
      %v784 = vld [vmem:[%s168 + $0x2f8] sm:$0xff]
      %v785 = vld [vmem:[%s168 + $0x300] sm:$0xff]
      %v786 = vld [vmem:[%s168 + $0x308] sm:$0xff]
      %v787 = vld [vmem:[%s168 + $0x310] sm:$0xff]
      %v788 = vld [vmem:[%s168 + $0x318] sm:$0xff]
      %v789 = vld [vmem:[%s168 + $0x320] sm:$0xff]
      %v790 = vld [vmem:[%s168 + $0x328] sm:$0xff]
      %v791 = vld [vmem:[%s168 + $0x330] sm:$0xff]
      %v792 = vld [vmem:[%s168 + $0x338] sm:$0xff]
      %v793 = vld [vmem:[%s168 + $0x340] sm:$0xff]
      %v794 = vld [vmem:[%s168 + $0x348] sm:$0xff]
      %v795 = vld [vmem:[%s168 + $0x350] sm:$0xff]
      %v796 = vld [vmem:[%s168 + $0x358] sm:$0xff]
      %v797 = vld [vmem:[%s168 + $0x360] sm:$0xff]
      %v798 = vld [vmem:[%s168 + $0x368] sm:$0xff]
      %v799 = vld [vmem:[%s168 + $0x370] sm:$0xff]
      %v800 = vld [vmem:[%s168 + $0x378] sm:$0xff]
      %v801 = vld [vmem:[%s168 + $0x380] sm:$0xff]
      %v802 = vld [vmem:[%s168 + $0x388] sm:$0xff]
      %v803 = vld [vmem:[%s168 + $0x390] sm:$0xff]
      %v804 = vld [vmem:[%s168 + $0x398] sm:$0xff]
      %v805 = vld [vmem:[%s168 + $0x3a0] sm:$0xff]
      %v806 = vld [vmem:[%s168 + $0x3a8] sm:$0xff]
      %v807 = vld [vmem:[%s168 + $0x3b0] sm:$0xff]
      %v808 = vld [vmem:[%s168 + $0x3b8] sm:$0xff]
      %v809 = vld [vmem:[%s168 + $0x3c0] sm:$0xff]
      %v810 = vld [vmem:[%s168 + $0x3c8] sm:$0xff]
      %v811 = vld [vmem:[%s168 + $0x3d0] sm:$0xff]
      %v812 = vld [vmem:[%s168 + $0x3d8] sm:$0xff]
      %v813 = vld [vmem:[%s168 + $0x3e0] sm:$0xff]
      %v814 = vld [vmem:[%s168 + $0x3e8] sm:$0xff]
      %v815 = vld [vmem:[%s168 + $0x3f0] sm:$0xff]
      %v816 = vld [vmem:[%s168 + $0x3f8] sm:$0xff]
      %v817 = vld [vmem:[%s168 + $0x400] sm:$0xff]
      %v818 = vld [vmem:[%s168 + $0x408] sm:$0xff]
      %v819 = vld [vmem:[%s168 + $0x410] sm:$0xff]
      %v820 = vld [vmem:[%s168 + $0x418] sm:$0xff]
      %v821 = vld [vmem:[%s168 + $0x420] sm:$0xff]
      %v822 = vld [vmem:[%s168 + $0x428] sm:$0xff]
      %v823 = vld [vmem:[%s168 + $0x430] sm:$0xff]
      %v824 = vld [vmem:[%s168 + $0x438] sm:$0xff]
      %v825 = vld [vmem:[%s168 + $0x440] sm:$0xff]
      %v826 = vld [vmem:[%s168 + $0x448] sm:$0xff]
      %v827 = vld [vmem:[%s168 + $0x450] sm:$0xff]
      %v828 = vld [vmem:[%s168 + $0x458] sm:$0xff]
      %v829 = vld [vmem:[%s168 + $0x460] sm:$0xff]
      %v830 = vld [vmem:[%s168 + $0x468] sm:$0xff]
      %v831 = vld [vmem:[%s168 + $0x470] sm:$0xff]
      %v832 = vld [vmem:[%s168 + $0x478] sm:$0xff]
      %v833 = vld [vmem:[%s168 + $0x480] sm:$0xff]
      %v834 = vld [vmem:[%s168 + $0x488] sm:$0xff]
      %v835 = vld [vmem:[%s168 + $0x490] sm:$0xff]
      %v836 = vld [vmem:[%s168 + $0x498] sm:$0xff]
      %v837 = vld [vmem:[%s168 + $0x4a0] sm:$0xff]
      %v838 = vld [vmem:[%s168 + $0x4a8] sm:$0xff]
      %v839 = vld [vmem:[%s168 + $0x4b0] sm:$0xff]
      %v840 = vld [vmem:[%s168 + $0x4b8] sm:$0xff]
      %v841 = vld [vmem:[%s168 + $0x4c0] sm:$0xff]
      %v842 = vld [vmem:[%s168 + $0x4c8] sm:$0xff]
      %v843 = vld [vmem:[%s168 + $0x4d0] sm:$0xff]
      %v844 = vld [vmem:[%s168 + $0x4d8] sm:$0xff]
      %v845 = vld [vmem:[%s168 + $0x4e0] sm:$0xff]
      %v846 = vld [vmem:[%s168 + $0x4e8] sm:$0xff]
      %v847 = vld [vmem:[%s168 + $0x4f0] sm:$0xff]
      %v848 = vld [vmem:[%s168 + $0x4f8] sm:$0xff]
      %v849 = vld [vmem:[%s168 + $0x500] sm:$0xff]
      %v850 = vld [vmem:[%s168 + $0x508] sm:$0xff]
      %v851 = vld [vmem:[%s168 + $0x510] sm:$0xff]
      %v852 = vld [vmem:[%s168 + $0x518] sm:$0xff]
      %v853 = vld [vmem:[%s168 + $0x520] sm:$0xff]
      %v854 = vld [vmem:[%s168 + $0x528] sm:$0xff]
      %v855 = vld [vmem:[%s168 + $0x530] sm:$0xff]
      %v856 = vld [vmem:[%s168 + $0x538] sm:$0xff]
      %v857 = vld [vmem:[%s168 + $0x540] sm:$0xff]
      %v858 = vld [vmem:[%s168 + $0x548] sm:$0xff]
      %v859 = vld [vmem:[%s168 + $0x550] sm:$0xff]
      %v860 = vld [vmem:[%s168 + $0x558] sm:$0xff]
      %v861 = vld [vmem:[%s168 + $0x560] sm:$0xff]
      %v862 = vld [vmem:[%s168 + $0x568] sm:$0xff]
      %v863 = vld [vmem:[%s168 + $0x570] sm:$0xff]
      %v864 = vld [vmem:[%s168 + $0x578] sm:$0xff]
      %v865 = vld [vmem:[%s168 + $0x580] sm:$0xff]
      %v866 = vld [vmem:[%s168 + $0x588] sm:$0xff]
      %v867 = vld [vmem:[%s168 + $0x590] sm:$0xff]
      %v868 = vld [vmem:[%s168 + $0x598] sm:$0xff]
      %v869 = vld [vmem:[%s168 + $0x5a0] sm:$0xff]
      %v870 = vld [vmem:[%s168 + $0x5a8] sm:$0xff]
      %v871 = vld [vmem:[%s168 + $0x5b0] sm:$0xff]
      %v872 = vld [vmem:[%s168 + $0x5b8] sm:$0xff]
      %v873 = vld [vmem:[%s168 + $0x5c0] sm:$0xff]
      %v874 = vld [vmem:[%s168 + $0x5c8] sm:$0xff]
      %v875 = vld [vmem:[%s168 + $0x5d0] sm:$0xff]
      %v876 = vld [vmem:[%s168 + $0x5d8] sm:$0xff]
      %v877 = vld [vmem:[%s168 + $0x5e0] sm:$0xff]
      %v878 = vld [vmem:[%s168 + $0x5e8] sm:$0xff]
      %v879 = vld [vmem:[%s168 + $0x5f0] sm:$0xff]
      %v880 = vld [vmem:[%s168 + $0x5f8] sm:$0xff]
      %v881 = vld [vmem:[%s168 + $0x600] sm:$0xff]
      %v882 = vld [vmem:[%s168 + $0x608] sm:$0xff]
      %v883 = vld [vmem:[%s168 + $0x610] sm:$0xff]
      %v884 = vld [vmem:[%s168 + $0x618] sm:$0xff]
      %v885 = vld [vmem:[%s168 + $0x620] sm:$0xff]
      %v886 = vld [vmem:[%s168 + $0x628] sm:$0xff]
      %v887 = vld [vmem:[%s168 + $0x630] sm:$0xff]
      %v888 = vld [vmem:[%s168 + $0x638] sm:$0xff]
      %v889 = vld [vmem:[%s168 + $0x640] sm:$0xff]
      %v890 = vld [vmem:[%s168 + $0x648] sm:$0xff]
      %v891 = vld [vmem:[%s168 + $0x650] sm:$0xff]
      %v892 = vld [vmem:[%s168 + $0x658] sm:$0xff]
      %v893 = vld [vmem:[%s168 + $0x660] sm:$0xff]
      %v894 = vld [vmem:[%s168 + $0x668] sm:$0xff]
      %v895 = vld [vmem:[%s168 + $0x670] sm:$0xff]
      %v896 = vld [vmem:[%s168 + $0x678] sm:$0xff]
      %v897 = vld [vmem:[%s168 + $0x680] sm:$0xff]
      %v898 = vld [vmem:[%s168 + $0x688] sm:$0xff]
      %v899 = vld [vmem:[%s168 + $0x690] sm:$0xff]
      %v900 = vld [vmem:[%s168 + $0x698] sm:$0xff]
      %v901 = vld [vmem:[%s168 + $0x6a0] sm:$0xff]
      %v902 = vld [vmem:[%s168 + $0x6a8] sm:$0xff]
      %v903 = vld [vmem:[%s168 + $0x6b0] sm:$0xff]
      %v904 = vld [vmem:[%s168 + $0x6b8] sm:$0xff]
      %v905 = vld [vmem:[%s168 + $0x6c0] sm:$0xff]
      %v906 = vld [vmem:[%s168 + $0x6c8] sm:$0xff]
      %v907 = vld [vmem:[%s168 + $0x6d0] sm:$0xff]
      %v908 = vld [vmem:[%s168 + $0x6d8] sm:$0xff]
      %v909 = vld [vmem:[%s168 + $0x6e0] sm:$0xff]
      %v910 = vld [vmem:[%s168 + $0x6e8] sm:$0xff]
      %v911 = vld [vmem:[%s168 + $0x6f0] sm:$0xff]
      %v912 = vld [vmem:[%s168 + $0x6f8] sm:$0xff]
      %v913 = vld [vmem:[%s168 + $0x700] sm:$0xff]
      %v914 = vld [vmem:[%s168 + $0x708] sm:$0xff]
      %v915 = vld [vmem:[%s168 + $0x710] sm:$0xff]
      %v916 = vld [vmem:[%s168 + $0x718] sm:$0xff]
      %v917 = vld [vmem:[%s168 + $0x720] sm:$0xff]
      %v918 = vld [vmem:[%s168 + $0x728] sm:$0xff]
      %v919 = vld [vmem:[%s168 + $0x730] sm:$0xff]
      %v920 = vld [vmem:[%s168 + $0x738] sm:$0xff]
      %v921 = vld [vmem:[%s168 + $0x740] sm:$0xff]
      %v922 = vld [vmem:[%s168 + $0x748] sm:$0xff]
      %v923 = vld [vmem:[%s168 + $0x750] sm:$0xff]
      %v924 = vld [vmem:[%s168 + $0x758] sm:$0xff]
      %v925 = vld [vmem:[%s168 + $0x760] sm:$0xff]
      %v926 = vld [vmem:[%s168 + $0x768] sm:$0xff]
      %v927 = vld [vmem:[%s168 + $0x770] sm:$0xff]
      %v928 = vld [vmem:[%s168 + $0x778] sm:$0xff]
      %v929 = vld [vmem:[%s168 + $0x780] sm:$0xff]
      %v930 = vld [vmem:[%s168 + $0x788] sm:$0xff]
      %v931 = vld [vmem:[%s168 + $0x790] sm:$0xff]
      %v932 = vld [vmem:[%s168 + $0x798] sm:$0xff]
      %v933 = vld [vmem:[%s168 + $0x7a0] sm:$0xff]
      %v934 = vld [vmem:[%s168 + $0x7a8] sm:$0xff]
      %v935 = vld [vmem:[%s168 + $0x7b0] sm:$0xff]
      %v936 = vld [vmem:[%s168 + $0x7b8] sm:$0xff]
      %v937 = vld [vmem:[%s168 + $0x7c0] sm:$0xff]
      %v938 = vld [vmem:[%s168 + $0x7c8] sm:$0xff]
      %v939 = vld [vmem:[%s168 + $0x7d0] sm:$0xff]
      %v940 = vld [vmem:[%s168 + $0x7d8] sm:$0xff]
      %v941 = vld [vmem:[%s168 + $0x7e0] sm:$0xff]
      %v942 = vld [vmem:[%s168 + $0x7e8] sm:$0xff]
      %v943 = vld [vmem:[%s168 + $0x7f0] sm:$0xff]
      %v944 = vld [vmem:[%s168 + $0x7f8] sm:$0xff]
      %v945 = vld [vmem:[%s168 + $0x800] sm:$0xff]
      %v946 = vld [vmem:[%s168 + $0x808] sm:$0xff]
      %v947 = vld [vmem:[%s168 + $0x810] sm:$0xff]
      %v948 = vld [vmem:[%s168 + $0x818] sm:$0xff]
      %v949 = vld [vmem:[%s168 + $0x820] sm:$0xff]
      %v950 = vld [vmem:[%s168 + $0x828] sm:$0xff]
      %v951 = vld [vmem:[%s168 + $0x830] sm:$0xff]
      %v952 = vld [vmem:[%s168 + $0x838] sm:$0xff]
      %v953 = vld [vmem:[%s168 + $0x840] sm:$0xff]
      %v954 = vld [vmem:[%s168 + $0x848] sm:$0xff]
      %v955 = vld [vmem:[%s168 + $0x850] sm:$0xff]
      %v956 = vld [vmem:[%s168 + $0x858] sm:$0xff]
      %v957 = vld [vmem:[%s168 + $0x860] sm:$0xff]
      %v958 = vld [vmem:[%s168 + $0x868] sm:$0xff]
      %v959 = vld [vmem:[%s168 + $0x870] sm:$0xff]
      %v960 = vld [vmem:[%s168 + $0x878] sm:$0xff]
      %v961 = vld [vmem:[%s168 + $0x880] sm:$0xff]
      %v962 = vld [vmem:[%s168 + $0x888] sm:$0xff]
      %v963 = vld [vmem:[%s168 + $0x890] sm:$0xff]
      %v964 = vld [vmem:[%s168 + $0x898] sm:$0xff]
      %v965 = vld [vmem:[%s168 + $0x8a0] sm:$0xff]
      %v966 = vld [vmem:[%s168 + $0x8a8] sm:$0xff]
      %v967 = vld [vmem:[%s168 + $0x8b0] sm:$0xff]
      %v968 = vld [vmem:[%s168 + $0x8b8] sm:$0xff]
      %v969 = vld [vmem:[%s168 + $0x8c0] sm:$0xff]
      %v970 = vld [vmem:[%s168 + $0x8c8] sm:$0xff]
      %v971 = vld [vmem:[%s168 + $0x8d0] sm:$0xff]
      %v972 = vld [vmem:[%s168 + $0x8d8] sm:$0xff]
      %v973 = vld [vmem:[%s168 + $0x8e0] sm:$0xff]
      %v974 = vld [vmem:[%s168 + $0x8e8] sm:$0xff]
      %v975 = vld [vmem:[%s168 + $0x8f0] sm:$0xff]
      %v976 = vld [vmem:[%s168 + $0x8f8] sm:$0xff]
      %v977 = vld [vmem:[%s168 + $0x900] sm:$0xff]
      %v978 = vld [vmem:[%s168 + $0x908] sm:$0xff]
      %v979 = vld [vmem:[%s168 + $0x910] sm:$0xff]
      %v980 = vld [vmem:[%s168 + $0x918] sm:$0xff]
      %v981 = vld [vmem:[%s168 + $0x920] sm:$0xff]
      %v982 = vld [vmem:[%s168 + $0x928] sm:$0xff]
      %v983 = vld [vmem:[%s168 + $0x930] sm:$0xff]
      %v984 = vld [vmem:[%s168 + $0x938] sm:$0xff]
      %v985 = vld [vmem:[%s168 + $0x940] sm:$0xff]
      %v986 = vld [vmem:[%s168 + $0x948] sm:$0xff]
      %v987 = vld [vmem:[%s168 + $0x950] sm:$0xff]
      %v988 = vld [vmem:[%s168 + $0x958] sm:$0xff]
      %v989 = vld [vmem:[%s168 + $0x960] sm:$0xff]
      %v990 = vld [vmem:[%s168 + $0x968] sm:$0xff]
      %v991 = vld [vmem:[%s168 + $0x970] sm:$0xff]
      %v992 = vld [vmem:[%s168 + $0x978] sm:$0xff]
      %v993 = vld [vmem:[%s168 + $0x980] sm:$0xff]
      %v994 = vld [vmem:[%s168 + $0x988] sm:$0xff]
      %v995 = vld [vmem:[%s168 + $0x990] sm:$0xff]
      %v996 = vld [vmem:[%s168 + $0x998] sm:$0xff]
      %v997 = vld [vmem:[%s168 + $0x9a0] sm:$0xff]
      %v998 = vld [vmem:[%s168 + $0x9a8] sm:$0xff]
      %v999 = vld [vmem:[%s168 + $0x9b0] sm:$0xff]
      %v1000 = vld [vmem:[%s168 + $0x9b8] sm:$0xff]
      %v1001 = vld [vmem:[%s168 + $0x9c0] sm:$0xff]
      %v1002 = vld [vmem:[%s168 + $0x9c8] sm:$0xff]
      %v1003 = vld [vmem:[%s168 + $0x9d0] sm:$0xff]
      %v1004 = vld [vmem:[%s168 + $0x9d8] sm:$0xff]
      %v1005 = vld [vmem:[%s168 + $0x9e0] sm:$0xff]
      %v1006 = vld [vmem:[%s168 + $0x9e8] sm:$0xff]
      %v1007 = vld [vmem:[%s168 + $0x9f0] sm:$0xff]
      %v1008 = vld [vmem:[%s168 + $0x9f8] sm:$0xff]
      %v1009 = vld [vmem:[%s168 + $0xa00] sm:$0xff]
      %v1010 = vld [vmem:[%s168 + $0xa08] sm:$0xff]
      %v1011 = vld [vmem:[%s168 + $0xa10] sm:$0xff]
      %v1012 = vld [vmem:[%s168 + $0xa18] sm:$0xff]
      %v1013 = vld [vmem:[%s168 + $0xa20] sm:$0xff]
      %v1014 = vld [vmem:[%s168 + $0xa28] sm:$0xff]
      %v1015 = vld [vmem:[%s168 + $0xa30] sm:$0xff]
      %v1016 = vld [vmem:[%s168 + $0xa38] sm:$0xff]
      %v1017 = vld [vmem:[%s168 + $0xa40] sm:$0xff]
      %v1018 = vld [vmem:[%s168 + $0xa48] sm:$0xff]
      %v1019 = vld [vmem:[%s168 + $0xa50] sm:$0xff]
      %v1020 = vld [vmem:[%s168 + $0xa58] sm:$0xff]
      %v1021 = vld [vmem:[%s168 + $0xa60] sm:$0xff]
      %v1022 = vld [vmem:[%s168 + $0xa68] sm:$0xff]
      %v1023 = vld [vmem:[%s168 + $0xa70] sm:$0xff]
      %v1024 = vld [vmem:[%s168 + $0xa78] sm:$0xff]
      %v1025 = vld [vmem:[%s168 + $0xa80] sm:$0xff]
      %v1026 = vld [vmem:[%s168 + $0xa88] sm:$0xff]
      %v1027 = vld [vmem:[%s168 + $0xa90] sm:$0xff]
      %v1028 = vld [vmem:[%s168 + $0xa98] sm:$0xff]
      %v1029 = vld [vmem:[%s168 + $0xaa0] sm:$0xff]
      %v1030 = vld [vmem:[%s168 + $0xaa8] sm:$0xff]
      %v1031 = vld [vmem:[%s168 + $0xab0] sm:$0xff]
      %v1032 = vld [vmem:[%s168 + $0xab8] sm:$0xff]
      %v1033 = vld [vmem:[%s168 + $0xac0] sm:$0xff]
      %v1034 = vld [vmem:[%s168 + $0xac8] sm:$0xff]
      %v1035 = vld [vmem:[%s168 + $0xad0] sm:$0xff]
      %v1036 = vld [vmem:[%s168 + $0xad8] sm:$0xff]
      %v1037 = vld [vmem:[%s168 + $0xae0] sm:$0xff]
      %v1038 = vld [vmem:[%s168 + $0xae8] sm:$0xff]
      %v1039 = vld [vmem:[%s168 + $0xaf0] sm:$0xff]
      %v1040 = vld [vmem:[%s168 + $0xaf8] sm:$0xff]
      %v1041 = vld [vmem:[%s168 + $0xb00] sm:$0xff]
      %v1042 = vld [vmem:[%s168 + $0xb08] sm:$0xff]
      %v1043 = vld [vmem:[%s168 + $0xb10] sm:$0xff]
      %v1044 = vld [vmem:[%s168 + $0xb18] sm:$0xff]
      %v1045 = vld [vmem:[%s168 + $0xb20] sm:$0xff]
      %v1046 = vld [vmem:[%s168 + $0xb28] sm:$0xff]
      %v1047 = vld [vmem:[%s168 + $0xb30] sm:$0xff]
      %v1048 = vld [vmem:[%s168 + $0xb38] sm:$0xff]
      %v1049 = vld [vmem:[%s168 + $0xb40] sm:$0xff]
      %v1050 = vld [vmem:[%s168 + $0xb48] sm:$0xff]
      %v1051 = vld [vmem:[%s168 + $0xb50] sm:$0xff]
      %v1052 = vld [vmem:[%s168 + $0xb58] sm:$0xff]
      %v1053 = vld [vmem:[%s168 + $0xb60] sm:$0xff]
      %v1054 = vld [vmem:[%s168 + $0xb68] sm:$0xff]
      %v1055 = vld [vmem:[%s168 + $0xb70] sm:$0xff]
      %v1056 = vld [vmem:[%s168 + $0xb78] sm:$0xff]
      %v1057 = vld [vmem:[%s168 + $0xb80] sm:$0xff]
      %v1058 = vld [vmem:[%s168 + $0xb88] sm:$0xff]
      %v1059 = vld [vmem:[%s168 + $0xb90] sm:$0xff]
      %v1060 = vld [vmem:[%s168 + $0xb98] sm:$0xff]
      %v1061 = vld [vmem:[%s168 + $0xba0] sm:$0xff]
      %v1062 = vld [vmem:[%s168 + $0xba8] sm:$0xff]
      %v1063 = vld [vmem:[%s168 + $0xbb0] sm:$0xff]
      %v1064 = vld [vmem:[%s168 + $0xbb8] sm:$0xff]
      %v1065 = vld [vmem:[%s168 + $0xbc0] sm:$0xff]
      %v1066 = vld [vmem:[%s168 + $0xbc8] sm:$0xff]
      %v1067 = vld [vmem:[%s168 + $0xbd0] sm:$0xff]
      %v1068 = vld [vmem:[%s168 + $0xbd8] sm:$0xff]
      %v1069 = vld [vmem:[%s168 + $0xbe0] sm:$0xff]
      %v1070 = vld [vmem:[%s168 + $0xbe8] sm:$0xff]
      %v1071 = vld [vmem:[%s168 + $0xbf0] sm:$0xff]
      %v1072 = vld [vmem:[%s168 + $0xbf8] sm:$0xff]
      %v1073 = vld [vmem:[%s168 + $0xc00] sm:$0xff]
      %v1074 = vld [vmem:[%s168 + $0xc08] sm:$0xff]
      %v1075 = vld [vmem:[%s168 + $0xc10] sm:$0xff]
      %v1076 = vld [vmem:[%s168 + $0xc18] sm:$0xff]
      %v1077 = vld [vmem:[%s168 + $0xc20] sm:$0xff]
      %v1078 = vld [vmem:[%s168 + $0xc28] sm:$0xff]
      %v1079 = vld [vmem:[%s168 + $0xc30] sm:$0xff]
      %v1080 = vld [vmem:[%s168 + $0xc38] sm:$0xff]
      %v1081 = vld [vmem:[%s168 + $0xc40] sm:$0xff]
      %v1082 = vld [vmem:[%s168 + $0xc48] sm:$0xff]
      %v1083 = vld [vmem:[%s168 + $0xc50] sm:$0xff]
      %v1084 = vld [vmem:[%s168 + $0xc58] sm:$0xff]
      %v1085 = vld [vmem:[%s168 + $0xc60] sm:$0xff]
      %v1086 = vld [vmem:[%s168 + $0xc68] sm:$0xff]
      %v1087 = vld [vmem:[%s168 + $0xc70] sm:$0xff]
      %v1088 = vld [vmem:[%s168 + $0xc78] sm:$0xff]
      %v1089 = vld [vmem:[%s168 + $0xc80] sm:$0xff]
      %v1090 = vld [vmem:[%s168 + $0xc88] sm:$0xff]
      %v1091 = vld [vmem:[%s168 + $0xc90] sm:$0xff]
      %v1092 = vld [vmem:[%s168 + $0xc98] sm:$0xff]
      %v1093 = vld [vmem:[%s168 + $0xca0] sm:$0xff]
      %v1094 = vld [vmem:[%s168 + $0xca8] sm:$0xff]
      %v1095 = vld [vmem:[%s168 + $0xcb0] sm:$0xff]
      %v1096 = vld [vmem:[%s168 + $0xcb8] sm:$0xff]
      %v1097 = vld [vmem:[%s168 + $0xcc0] sm:$0xff]
      %v1098 = vld [vmem:[%s168 + $0xcc8] sm:$0xff]
      %v1099 = vld [vmem:[%s168 + $0xcd0] sm:$0xff]
      %v1100 = vld [vmem:[%s168 + $0xcd8] sm:$0xff]
      %v1101 = vld [vmem:[%s168 + $0xce0] sm:$0xff]
      %v1102 = vld [vmem:[%s168 + $0xce8] sm:$0xff]
      %v1103 = vld [vmem:[%s168 + $0xcf0] sm:$0xff]
      %v1104 = vld [vmem:[%s168 + $0xcf8] sm:$0xff]
      %v1105 = vld [vmem:[%s168 + $0xd00] sm:$0xff]
      %v1106 = vld [vmem:[%s168 + $0xd08] sm:$0xff]
      %v1107 = vld [vmem:[%s168 + $0xd10] sm:$0xff]
      %v1108 = vld [vmem:[%s168 + $0xd18] sm:$0xff]
      %v1109 = vld [vmem:[%s168 + $0xd20] sm:$0xff]
      %v1110 = vld [vmem:[%s168 + $0xd28] sm:$0xff]
      %v1111 = vld [vmem:[%s168 + $0xd30] sm:$0xff]
      %v1112 = vld [vmem:[%s168 + $0xd38] sm:$0xff]
      %v1113 = vld [vmem:[%s168 + $0xd40] sm:$0xff]
      %v1114 = vld [vmem:[%s168 + $0xd48] sm:$0xff]
      %v1115 = vld [vmem:[%s168 + $0xd50] sm:$0xff]
      %v1116 = vld [vmem:[%s168 + $0xd58] sm:$0xff]
      %v1117 = vld [vmem:[%s168 + $0xd60] sm:$0xff]
      %v1118 = vld [vmem:[%s168 + $0xd68] sm:$0xff]
      %v1119 = vld [vmem:[%s168 + $0xd70] sm:$0xff]
      %v1120 = vld [vmem:[%s168 + $0xd78] sm:$0xff]
      %v1121 = vld [vmem:[%s168 + $0xd80] sm:$0xff]
      %v1122 = vld [vmem:[%s168 + $0xd88] sm:$0xff]
      %v1123 = vld [vmem:[%s168 + $0xd90] sm:$0xff]
      %v1124 = vld [vmem:[%s168 + $0xd98] sm:$0xff]
      %v1125 = vld [vmem:[%s168 + $0xda0] sm:$0xff]
      %v1126 = vld [vmem:[%s168 + $0xda8] sm:$0xff]
      %v1127 = vld [vmem:[%s168 + $0xdb0] sm:$0xff]
      %v1128 = vld [vmem:[%s168 + $0xdb8] sm:$0xff]
      %v1129 = vld [vmem:[%s168 + $0xdc0] sm:$0xff]
      %v1130 = vld [vmem:[%s168 + $0xdc8] sm:$0xff]
      %v1131 = vld [vmem:[%s168 + $0xdd0] sm:$0xff]
      %v1132 = vld [vmem:[%s168 + $0xdd8] sm:$0xff]
      %v1133 = vld [vmem:[%s168 + $0xde0] sm:$0xff]
      %v1134 = vld [vmem:[%s168 + $0xde8] sm:$0xff]
      %v1135 = vld [vmem:[%s168 + $0xdf0] sm:$0xff]
      %v1136 = vld [vmem:[%s168 + $0xdf8] sm:$0xff]
      %v1137 = vld [vmem:[%s168 + $0xe00] sm:$0xff]
      %v1138 = vld [vmem:[%s168 + $0xe08] sm:$0xff]
      %v1139 = vld [vmem:[%s168 + $0xe10] sm:$0xff]
      %v1140 = vld [vmem:[%s168 + $0xe18] sm:$0xff]
      %v1141 = vld [vmem:[%s168 + $0xe20] sm:$0xff]
      %v1142 = vld [vmem:[%s168 + $0xe28] sm:$0xff]
      %v1143 = vld [vmem:[%s168 + $0xe30] sm:$0xff]
      %v1144 = vld [vmem:[%s168 + $0xe38] sm:$0xff]
      %v1145 = vld [vmem:[%s168 + $0xe40] sm:$0xff]
      %v1146 = vld [vmem:[%s168 + $0xe48] sm:$0xff]
      %v1147 = vld [vmem:[%s168 + $0xe50] sm:$0xff]
      %v1148 = vld [vmem:[%s168 + $0xe58] sm:$0xff]
      %v1149 = vld [vmem:[%s168 + $0xe60] sm:$0xff]
      %v1150 = vld [vmem:[%s168 + $0xe68] sm:$0xff]
      %v1151 = vld [vmem:[%s168 + $0xe70] sm:$0xff]
      %v1152 = vld [vmem:[%s168 + $0xe78] sm:$0xff]
      %v1153 = vld [vmem:[%s168 + $0xe80] sm:$0xff]
      %v1154 = vld [vmem:[%s168 + $0xe88] sm:$0xff]
      %v1155 = vld [vmem:[%s168 + $0xe90] sm:$0xff]
      %v1156 = vld [vmem:[%s168 + $0xe98] sm:$0xff]
      %v1157 = vld [vmem:[%s168 + $0xea0] sm:$0xff]
      %v1158 = vld [vmem:[%s168 + $0xea8] sm:$0xff]
      %v1159 = vld [vmem:[%s168 + $0xeb0] sm:$0xff]
      %v1160 = vld [vmem:[%s168 + $0xeb8] sm:$0xff]
      %v1161 = vld [vmem:[%s168 + $0xec0] sm:$0xff]
      %v1162 = vld [vmem:[%s168 + $0xec8] sm:$0xff]
      %v1163 = vld [vmem:[%s168 + $0xed0] sm:$0xff]
      %v1164 = vld [vmem:[%s168 + $0xed8] sm:$0xff]
      %v1165 = vld [vmem:[%s168 + $0xee0] sm:$0xff]
      %v1166 = vld [vmem:[%s168 + $0xee8] sm:$0xff]
      %v1167 = vld [vmem:[%s168 + $0xef0] sm:$0xff]
      %v1168 = vld [vmem:[%s168 + $0xef8] sm:$0xff]
      %v1169 = vld [vmem:[%s168 + $0xf00] sm:$0xff]
      %v1170 = vld [vmem:[%s168 + $0xf08] sm:$0xff]
      %v1171 = vld [vmem:[%s168 + $0xf10] sm:$0xff]
      %v1172 = vld [vmem:[%s168 + $0xf18] sm:$0xff]
      %v1173 = vld [vmem:[%s168 + $0xf20] sm:$0xff]
      %v1174 = vld [vmem:[%s168 + $0xf28] sm:$0xff]
      %v1175 = vld [vmem:[%s168 + $0xf30] sm:$0xff]
      %v1176 = vld [vmem:[%s168 + $0xf38] sm:$0xff]
      %v1177 = vld [vmem:[%s168 + $0xf40] sm:$0xff]
      %v1178 = vld [vmem:[%s168 + $0xf48] sm:$0xff]
      %v1179 = vld [vmem:[%s168 + $0xf50] sm:$0xff]
      %v1180 = vld [vmem:[%s168 + $0xf58] sm:$0xff]
      %v1181 = vld [vmem:[%s168 + $0xf60] sm:$0xff]
      %v1182 = vld [vmem:[%s168 + $0xf68] sm:$0xff]
      %v1183 = vld [vmem:[%s168 + $0xf70] sm:$0xff]
      %v1184 = vld [vmem:[%s168 + $0xf78] sm:$0xff]
      %v1185 = vld [vmem:[%s168 + $0xf80] sm:$0xff]
      %v1186 = vld [vmem:[%s168 + $0xf88] sm:$0xff]
      %v1187 = vld [vmem:[%s168 + $0xf90] sm:$0xff]
      %v1188 = vld [vmem:[%s168 + $0xf98] sm:$0xff]
      %v1189 = vld [vmem:[%s168 + $0xfa0] sm:$0xff]
      %v1190 = vld [vmem:[%s168 + $0xfa8] sm:$0xff]
      %v1191 = vld [vmem:[%s168 + $0xfb0] sm:$0xff]
      %v1192 = vld [vmem:[%s168 + $0xfb8] sm:$0xff]
      %v1193 = vld [vmem:[%s168 + $0xfc0] sm:$0xff]
      %v1194 = vld [vmem:[%s168 + $0xfc8] sm:$0xff]
      %v1195 = vld [vmem:[%s168 + $0xfd0] sm:$0xff]
      %v1196 = vld [vmem:[%s168 + $0xfd8] sm:$0xff]
      %v1197 = vld [vmem:[%s168 + $0xfe0] sm:$0xff]
      %v1198 = vld [vmem:[%s168 + $0xfe8] sm:$0xff]
      %v1199 = vld [vmem:[%s168 + $0xff0] sm:$0xff]
      %v1200 = vld [vmem:[%s168 + $0xff8] sm:$0xff]
      %v1201 = vadd.f32 %v177, %v689
      %v1202 = vadd.f32 %v178, %v690
      %v1203 = vadd.f32 %v179, %v691
      %v1204 = vadd.f32 %v180, %v692
      %v1205 = vadd.f32 %v181, %v693
      %v1206 = vadd.f32 %v182, %v694
      %v1207 = vadd.f32 %v183, %v695
      %v1208 = vadd.f32 %v184, %v696
      %v1209 = vadd.f32 %v185, %v697
      %v1210 = vadd.f32 %v186, %v698
      %v1211 = vadd.f32 %v187, %v699
      %v1212 = vadd.f32 %v188, %v700
      %v1213 = vadd.f32 %v189, %v701
      %v1214 = vadd.f32 %v190, %v702
      %v1215 = vadd.f32 %v191, %v703
      %v1216 = vadd.f32 %v192, %v704
      %v1217 = vadd.f32 %v193, %v705
      %v1218 = vadd.f32 %v194, %v706
      %v1219 = vadd.f32 %v195, %v707
      %v1220 = vadd.f32 %v196, %v708
      %v1221 = vadd.f32 %v197, %v709
      %v1222 = vadd.f32 %v198, %v710
      %v1223 = vadd.f32 %v199, %v711
      %v1224 = vadd.f32 %v200, %v712
      %v1225 = vadd.f32 %v201, %v713
      %v1226 = vadd.f32 %v202, %v714
      %v1227 = vadd.f32 %v203, %v715
      %v1228 = vadd.f32 %v204, %v716
      %v1229 = vadd.f32 %v205, %v717
      %v1230 = vadd.f32 %v206, %v718
      %v1231 = vadd.f32 %v207, %v719
      %v1232 = vadd.f32 %v208, %v720
      %v1233 = vadd.f32 %v209, %v721
      %v1234 = vadd.f32 %v210, %v722
      %v1235 = vadd.f32 %v211, %v723
      %v1236 = vadd.f32 %v212, %v724
      %v1237 = vadd.f32 %v213, %v725
      %v1238 = vadd.f32 %v214, %v726
      %v1239 = vadd.f32 %v215, %v727
      %v1240 = vadd.f32 %v216, %v728
      %v1241 = vadd.f32 %v217, %v729
      %v1242 = vadd.f32 %v218, %v730
      %v1243 = vadd.f32 %v219, %v731
      %v1244 = vadd.f32 %v220, %v732
      %v1245 = vadd.f32 %v221, %v733
      %v1246 = vadd.f32 %v222, %v734
      %v1247 = vadd.f32 %v223, %v735
      %v1248 = vadd.f32 %v224, %v736
      %v1249 = vadd.f32 %v225, %v737
      %v1250 = vadd.f32 %v226, %v738
      %v1251 = vadd.f32 %v227, %v739
      %v1252 = vadd.f32 %v228, %v740
      %v1253 = vadd.f32 %v229, %v741
      %v1254 = vadd.f32 %v230, %v742
      %v1255 = vadd.f32 %v231, %v743
      %v1256 = vadd.f32 %v232, %v744
      %v1257 = vadd.f32 %v233, %v745
      %v1258 = vadd.f32 %v234, %v746
      %v1259 = vadd.f32 %v235, %v747
      %v1260 = vadd.f32 %v236, %v748
      %v1261 = vadd.f32 %v237, %v749
      %v1262 = vadd.f32 %v238, %v750
      %v1263 = vadd.f32 %v239, %v751
      %v1264 = vadd.f32 %v240, %v752
      %v1265 = vadd.f32 %v241, %v753
      %v1266 = vadd.f32 %v242, %v754
      %v1267 = vadd.f32 %v243, %v755
      %v1268 = vadd.f32 %v244, %v756
      %v1269 = vadd.f32 %v245, %v757
      %v1270 = vadd.f32 %v246, %v758
      %v1271 = vadd.f32 %v247, %v759
      %v1272 = vadd.f32 %v248, %v760
      %v1273 = vadd.f32 %v249, %v761
      %v1274 = vadd.f32 %v250, %v762
      %v1275 = vadd.f32 %v251, %v763
      %v1276 = vadd.f32 %v252, %v764
      %v1277 = vadd.f32 %v253, %v765
      %v1278 = vadd.f32 %v254, %v766
      %v1279 = vadd.f32 %v255, %v767
      %v1280 = vadd.f32 %v256, %v768
      %v1281 = vadd.f32 %v257, %v769
      %v1282 = vadd.f32 %v258, %v770
      %v1283 = vadd.f32 %v259, %v771
      %v1284 = vadd.f32 %v260, %v772
      %v1285 = vadd.f32 %v261, %v773
      %v1286 = vadd.f32 %v262, %v774
      %v1287 = vadd.f32 %v263, %v775
      %v1288 = vadd.f32 %v264, %v776
      %v1289 = vadd.f32 %v265, %v777
      %v1290 = vadd.f32 %v266, %v778
      %v1291 = vadd.f32 %v267, %v779
      %v1292 = vadd.f32 %v268, %v780
      %v1293 = vadd.f32 %v269, %v781
      %v1294 = vadd.f32 %v270, %v782
      %v1295 = vadd.f32 %v271, %v783
      %v1296 = vadd.f32 %v272, %v784
      %v1297 = vadd.f32 %v273, %v785
      %v1298 = vadd.f32 %v274, %v786
      %v1299 = vadd.f32 %v275, %v787
      %v1300 = vadd.f32 %v276, %v788
      %v1301 = vadd.f32 %v277, %v789
      %v1302 = vadd.f32 %v278, %v790
      %v1303 = vadd.f32 %v279, %v791
      %v1304 = vadd.f32 %v280, %v792
      %v1305 = vadd.f32 %v281, %v793
      %v1306 = vadd.f32 %v282, %v794
      %v1307 = vadd.f32 %v283, %v795
      %v1308 = vadd.f32 %v284, %v796
      %v1309 = vadd.f32 %v285, %v797
      %v1310 = vadd.f32 %v286, %v798
      %v1311 = vadd.f32 %v287, %v799
      %v1312 = vadd.f32 %v288, %v800
      %v1313 = vadd.f32 %v289, %v801
      %v1314 = vadd.f32 %v290, %v802
      %v1315 = vadd.f32 %v291, %v803
      %v1316 = vadd.f32 %v292, %v804
      %v1317 = vadd.f32 %v293, %v805
      %v1318 = vadd.f32 %v294, %v806
      %v1319 = vadd.f32 %v295, %v807
      %v1320 = vadd.f32 %v296, %v808
      %v1321 = vadd.f32 %v297, %v809
      %v1322 = vadd.f32 %v298, %v810
      %v1323 = vadd.f32 %v299, %v811
      %v1324 = vadd.f32 %v300, %v812
      %v1325 = vadd.f32 %v301, %v813
      %v1326 = vadd.f32 %v302, %v814
      %v1327 = vadd.f32 %v303, %v815
      %v1328 = vadd.f32 %v304, %v816
      %v1329 = vadd.f32 %v305, %v817
      %v1330 = vadd.f32 %v306, %v818
      %v1331 = vadd.f32 %v307, %v819
      %v1332 = vadd.f32 %v308, %v820
      %v1333 = vadd.f32 %v309, %v821
      %v1334 = vadd.f32 %v310, %v822
      %v1335 = vadd.f32 %v311, %v823
      %v1336 = vadd.f32 %v312, %v824
      %v1337 = vadd.f32 %v313, %v825
      %v1338 = vadd.f32 %v314, %v826
      %v1339 = vadd.f32 %v315, %v827
      %v1340 = vadd.f32 %v316, %v828
      %v1341 = vadd.f32 %v317, %v829
      %v1342 = vadd.f32 %v318, %v830
      %v1343 = vadd.f32 %v319, %v831
      %v1344 = vadd.f32 %v320, %v832
      %v1345 = vadd.f32 %v321, %v833
      %v1346 = vadd.f32 %v322, %v834
      %v1347 = vadd.f32 %v323, %v835
      %v1348 = vadd.f32 %v324, %v836
      %v1349 = vadd.f32 %v325, %v837
      %v1350 = vadd.f32 %v326, %v838
      %v1351 = vadd.f32 %v327, %v839
      %v1352 = vadd.f32 %v328, %v840
      %v1353 = vadd.f32 %v329, %v841
      %v1354 = vadd.f32 %v330, %v842
      %v1355 = vadd.f32 %v331, %v843
      %v1356 = vadd.f32 %v332, %v844
      %v1357 = vadd.f32 %v333, %v845
      %v1358 = vadd.f32 %v334, %v846
      %v1359 = vadd.f32 %v335, %v847
      %v1360 = vadd.f32 %v336, %v848
      %v1361 = vadd.f32 %v337, %v849
      %v1362 = vadd.f32 %v338, %v850
      %v1363 = vadd.f32 %v339, %v851
      %v1364 = vadd.f32 %v340, %v852
      %v1365 = vadd.f32 %v341, %v853
      %v1366 = vadd.f32 %v342, %v854
      %v1367 = vadd.f32 %v343, %v855
      %v1368 = vadd.f32 %v344, %v856
      %v1369 = vadd.f32 %v345, %v857
      %v1370 = vadd.f32 %v346, %v858
      %v1371 = vadd.f32 %v347, %v859
      %v1372 = vadd.f32 %v348, %v860
      %v1373 = vadd.f32 %v349, %v861
      %v1374 = vadd.f32 %v350, %v862
      %v1375 = vadd.f32 %v351, %v863
      %v1376 = vadd.f32 %v352, %v864
      %v1377 = vadd.f32 %v353, %v865
      %v1378 = vadd.f32 %v354, %v866
      %v1379 = vadd.f32 %v355, %v867
      %v1380 = vadd.f32 %v356, %v868
      %v1381 = vadd.f32 %v357, %v869
      %v1382 = vadd.f32 %v358, %v870
      %v1383 = vadd.f32 %v359, %v871
      %v1384 = vadd.f32 %v360, %v872
      %v1385 = vadd.f32 %v361, %v873
      %v1386 = vadd.f32 %v362, %v874
      %v1387 = vadd.f32 %v363, %v875
      %v1388 = vadd.f32 %v364, %v876
      %v1389 = vadd.f32 %v365, %v877
      %v1390 = vadd.f32 %v366, %v878
      %v1391 = vadd.f32 %v367, %v879
      %v1392 = vadd.f32 %v368, %v880
      %v1393 = vadd.f32 %v369, %v881
      %v1394 = vadd.f32 %v370, %v882
      %v1395 = vadd.f32 %v371, %v883
      %v1396 = vadd.f32 %v372, %v884
      %v1397 = vadd.f32 %v373, %v885
      %v1398 = vadd.f32 %v374, %v886
      %v1399 = vadd.f32 %v375, %v887
      %v1400 = vadd.f32 %v376, %v888
      %v1401 = vadd.f32 %v377, %v889
      %v1402 = vadd.f32 %v378, %v890
      %v1403 = vadd.f32 %v379, %v891
      %v1404 = vadd.f32 %v380, %v892
      %v1405 = vadd.f32 %v381, %v893
      %v1406 = vadd.f32 %v382, %v894
      %v1407 = vadd.f32 %v383, %v895
      %v1408 = vadd.f32 %v384, %v896
      %v1409 = vadd.f32 %v385, %v897
      %v1410 = vadd.f32 %v386, %v898
      %v1411 = vadd.f32 %v387, %v899
      %v1412 = vadd.f32 %v388, %v900
      %v1413 = vadd.f32 %v389, %v901
      %v1414 = vadd.f32 %v390, %v902
      %v1415 = vadd.f32 %v391, %v903
      %v1416 = vadd.f32 %v392, %v904
      %v1417 = vadd.f32 %v393, %v905
      %v1418 = vadd.f32 %v394, %v906
      %v1419 = vadd.f32 %v395, %v907
      %v1420 = vadd.f32 %v396, %v908
      %v1421 = vadd.f32 %v397, %v909
      %v1422 = vadd.f32 %v398, %v910
      %v1423 = vadd.f32 %v399, %v911
      %v1424 = vadd.f32 %v400, %v912
      %v1425 = vadd.f32 %v401, %v913
      %v1426 = vadd.f32 %v402, %v914
      %v1427 = vadd.f32 %v403, %v915
      %v1428 = vadd.f32 %v404, %v916
      %v1429 = vadd.f32 %v405, %v917
      %v1430 = vadd.f32 %v406, %v918
      %v1431 = vadd.f32 %v407, %v919
      %v1432 = vadd.f32 %v408, %v920
      %v1433 = vadd.f32 %v409, %v921
      %v1434 = vadd.f32 %v410, %v922
      %v1435 = vadd.f32 %v411, %v923
      %v1436 = vadd.f32 %v412, %v924
      %v1437 = vadd.f32 %v413, %v925
      %v1438 = vadd.f32 %v414, %v926
      %v1439 = vadd.f32 %v415, %v927
      %v1440 = vadd.f32 %v416, %v928
      %v1441 = vadd.f32 %v417, %v929
      %v1442 = vadd.f32 %v418, %v930
      %v1443 = vadd.f32 %v419, %v931
      %v1444 = vadd.f32 %v420, %v932
      %v1445 = vadd.f32 %v421, %v933
      %v1446 = vadd.f32 %v422, %v934
      %v1447 = vadd.f32 %v423, %v935
      %v1448 = vadd.f32 %v424, %v936
      %v1449 = vadd.f32 %v425, %v937
      %v1450 = vadd.f32 %v426, %v938
      %v1451 = vadd.f32 %v427, %v939
      %v1452 = vadd.f32 %v428, %v940
      %v1453 = vadd.f32 %v429, %v941
      %v1454 = vadd.f32 %v430, %v942
      %v1455 = vadd.f32 %v431, %v943
      %v1456 = vadd.f32 %v432, %v944
      %v1457 = vadd.f32 %v433, %v945
      %v1458 = vadd.f32 %v434, %v946
      %v1459 = vadd.f32 %v435, %v947
      %v1460 = vadd.f32 %v436, %v948
      %v1461 = vadd.f32 %v437, %v949
      %v1462 = vadd.f32 %v438, %v950
      %v1463 = vadd.f32 %v439, %v951
      %v1464 = vadd.f32 %v440, %v952
      %v1465 = vadd.f32 %v441, %v953
      %v1466 = vadd.f32 %v442, %v954
      %v1467 = vadd.f32 %v443, %v955
      %v1468 = vadd.f32 %v444, %v956
      %v1469 = vadd.f32 %v445, %v957
      %v1470 = vadd.f32 %v446, %v958
      %v1471 = vadd.f32 %v447, %v959
      %v1472 = vadd.f32 %v448, %v960
      %v1473 = vadd.f32 %v449, %v961
      %v1474 = vadd.f32 %v450, %v962
      %v1475 = vadd.f32 %v451, %v963
      %v1476 = vadd.f32 %v452, %v964
      %v1477 = vadd.f32 %v453, %v965
      %v1478 = vadd.f32 %v454, %v966
      %v1479 = vadd.f32 %v455, %v967
      %v1480 = vadd.f32 %v456, %v968
      %v1481 = vadd.f32 %v457, %v969
      %v1482 = vadd.f32 %v458, %v970
      %v1483 = vadd.f32 %v459, %v971
      %v1484 = vadd.f32 %v460, %v972
      %v1485 = vadd.f32 %v461, %v973
      %v1486 = vadd.f32 %v462, %v974
      %v1487 = vadd.f32 %v463, %v975
      %v1488 = vadd.f32 %v464, %v976
      %v1489 = vadd.f32 %v465, %v977
      %v1490 = vadd.f32 %v466, %v978
      %v1491 = vadd.f32 %v467, %v979
      %v1492 = vadd.f32 %v468, %v980
      %v1493 = vadd.f32 %v469, %v981
      %v1494 = vadd.f32 %v470, %v982
      %v1495 = vadd.f32 %v471, %v983
      %v1496 = vadd.f32 %v472, %v984
      %v1497 = vadd.f32 %v473, %v985
      %v1498 = vadd.f32 %v474, %v986
      %v1499 = vadd.f32 %v475, %v987
      %v1500 = vadd.f32 %v476, %v988
      %v1501 = vadd.f32 %v477, %v989
      %v1502 = vadd.f32 %v478, %v990
      %v1503 = vadd.f32 %v479, %v991
      %v1504 = vadd.f32 %v480, %v992
      %v1505 = vadd.f32 %v481, %v993
      %v1506 = vadd.f32 %v482, %v994
      %v1507 = vadd.f32 %v483, %v995
      %v1508 = vadd.f32 %v484, %v996
      %v1509 = vadd.f32 %v485, %v997
      %v1510 = vadd.f32 %v486, %v998
      %v1511 = vadd.f32 %v487, %v999
      %v1512 = vadd.f32 %v488, %v1000
      %v1513 = vadd.f32 %v489, %v1001
      %v1514 = vadd.f32 %v490, %v1002
      %v1515 = vadd.f32 %v491, %v1003
      %v1516 = vadd.f32 %v492, %v1004
      %v1517 = vadd.f32 %v493, %v1005
      %v1518 = vadd.f32 %v494, %v1006
      %v1519 = vadd.f32 %v495, %v1007
      %v1520 = vadd.f32 %v496, %v1008
      %v1521 = vadd.f32 %v497, %v1009
      %v1522 = vadd.f32 %v498, %v1010
      %v1523 = vadd.f32 %v499, %v1011
      %v1524 = vadd.f32 %v500, %v1012
      %v1525 = vadd.f32 %v501, %v1013
      %v1526 = vadd.f32 %v502, %v1014
      %v1527 = vadd.f32 %v503, %v1015
      %v1528 = vadd.f32 %v504, %v1016
      %v1529 = vadd.f32 %v505, %v1017
      %v1530 = vadd.f32 %v506, %v1018
      %v1531 = vadd.f32 %v507, %v1019
      %v1532 = vadd.f32 %v508, %v1020
      %v1533 = vadd.f32 %v509, %v1021
      %v1534 = vadd.f32 %v510, %v1022
      %v1535 = vadd.f32 %v511, %v1023
      %v1536 = vadd.f32 %v512, %v1024
      %v1537 = vadd.f32 %v513, %v1025
      %v1538 = vadd.f32 %v514, %v1026
      %v1539 = vadd.f32 %v515, %v1027
      %v1540 = vadd.f32 %v516, %v1028
      %v1541 = vadd.f32 %v517, %v1029
      %v1542 = vadd.f32 %v518, %v1030
      %v1543 = vadd.f32 %v519, %v1031
      %v1544 = vadd.f32 %v520, %v1032
      %v1545 = vadd.f32 %v521, %v1033
      %v1546 = vadd.f32 %v522, %v1034
      %v1547 = vadd.f32 %v523, %v1035
      %v1548 = vadd.f32 %v524, %v1036
      %v1549 = vadd.f32 %v525, %v1037
      %v1550 = vadd.f32 %v526, %v1038
      %v1551 = vadd.f32 %v527, %v1039
      %v1552 = vadd.f32 %v528, %v1040
      %v1553 = vadd.f32 %v529, %v1041
      %v1554 = vadd.f32 %v530, %v1042
      %v1555 = vadd.f32 %v531, %v1043
      %v1556 = vadd.f32 %v532, %v1044
      %v1557 = vadd.f32 %v533, %v1045
      %v1558 = vadd.f32 %v534, %v1046
      %v1559 = vadd.f32 %v535, %v1047
      %v1560 = vadd.f32 %v536, %v1048
      %v1561 = vadd.f32 %v537, %v1049
      %v1562 = vadd.f32 %v538, %v1050
      %v1563 = vadd.f32 %v539, %v1051
      %v1564 = vadd.f32 %v540, %v1052
      %v1565 = vadd.f32 %v541, %v1053
      %v1566 = vadd.f32 %v542, %v1054
      %v1567 = vadd.f32 %v543, %v1055
      %v1568 = vadd.f32 %v544, %v1056
      %v1569 = vadd.f32 %v545, %v1057
      %v1570 = vadd.f32 %v546, %v1058
      %v1571 = vadd.f32 %v547, %v1059
      %v1572 = vadd.f32 %v548, %v1060
      %v1573 = vadd.f32 %v549, %v1061
      %v1574 = vadd.f32 %v550, %v1062
      %v1575 = vadd.f32 %v551, %v1063
      %v1576 = vadd.f32 %v552, %v1064
      %v1577 = vadd.f32 %v553, %v1065
      %v1578 = vadd.f32 %v554, %v1066
      %v1579 = vadd.f32 %v555, %v1067
      %v1580 = vadd.f32 %v556, %v1068
      %v1581 = vadd.f32 %v557, %v1069
      %v1582 = vadd.f32 %v558, %v1070
      %v1583 = vadd.f32 %v559, %v1071
      %v1584 = vadd.f32 %v560, %v1072
      %v1585 = vadd.f32 %v561, %v1073
      %v1586 = vadd.f32 %v562, %v1074
      %v1587 = vadd.f32 %v563, %v1075
      %v1588 = vadd.f32 %v564, %v1076
      %v1589 = vadd.f32 %v565, %v1077
      %v1590 = vadd.f32 %v566, %v1078
      %v1591 = vadd.f32 %v567, %v1079
      %v1592 = vadd.f32 %v568, %v1080
      %v1593 = vadd.f32 %v569, %v1081
      %v1594 = vadd.f32 %v570, %v1082
      %v1595 = vadd.f32 %v571, %v1083
      %v1596 = vadd.f32 %v572, %v1084
      %v1597 = vadd.f32 %v573, %v1085
      %v1598 = vadd.f32 %v574, %v1086
      %v1599 = vadd.f32 %v575, %v1087
      %v1600 = vadd.f32 %v576, %v1088
      %v1601 = vadd.f32 %v577, %v1089
      %v1602 = vadd.f32 %v578, %v1090
      %v1603 = vadd.f32 %v579, %v1091
      %v1604 = vadd.f32 %v580, %v1092
      %v1605 = vadd.f32 %v581, %v1093
      %v1606 = vadd.f32 %v582, %v1094
      %v1607 = vadd.f32 %v583, %v1095
      %v1608 = vadd.f32 %v584, %v1096
      %v1609 = vadd.f32 %v585, %v1097
      %v1610 = vadd.f32 %v586, %v1098
      %v1611 = vadd.f32 %v587, %v1099
      %v1612 = vadd.f32 %v588, %v1100
      %v1613 = vadd.f32 %v589, %v1101
      %v1614 = vadd.f32 %v590, %v1102
      %v1615 = vadd.f32 %v591, %v1103
      %v1616 = vadd.f32 %v592, %v1104
      %v1617 = vadd.f32 %v593, %v1105
      %v1618 = vadd.f32 %v594, %v1106
      %v1619 = vadd.f32 %v595, %v1107
      %v1620 = vadd.f32 %v596, %v1108
      %v1621 = vadd.f32 %v597, %v1109
      %v1622 = vadd.f32 %v598, %v1110
      %v1623 = vadd.f32 %v599, %v1111
      %v1624 = vadd.f32 %v600, %v1112
      %v1625 = vadd.f32 %v601, %v1113
      %v1626 = vadd.f32 %v602, %v1114
      %v1627 = vadd.f32 %v603, %v1115
      %v1628 = vadd.f32 %v604, %v1116
      %v1629 = vadd.f32 %v605, %v1117
      %v1630 = vadd.f32 %v606, %v1118
      %v1631 = vadd.f32 %v607, %v1119
      %v1632 = vadd.f32 %v608, %v1120
      %v1633 = vadd.f32 %v609, %v1121
      %v1634 = vadd.f32 %v610, %v1122
      %v1635 = vadd.f32 %v611, %v1123
      %v1636 = vadd.f32 %v612, %v1124
      %v1637 = vadd.f32 %v613, %v1125
      %v1638 = vadd.f32 %v614, %v1126
      %v1639 = vadd.f32 %v615, %v1127
      %v1640 = vadd.f32 %v616, %v1128
      %v1641 = vadd.f32 %v617, %v1129
      %v1642 = vadd.f32 %v618, %v1130
      %v1643 = vadd.f32 %v619, %v1131
      %v1644 = vadd.f32 %v620, %v1132
      %v1645 = vadd.f32 %v621, %v1133
      %v1646 = vadd.f32 %v622, %v1134
      %v1647 = vadd.f32 %v623, %v1135
      %v1648 = vadd.f32 %v624, %v1136
      %v1649 = vadd.f32 %v625, %v1137
      %v1650 = vadd.f32 %v626, %v1138
      %v1651 = vadd.f32 %v627, %v1139
      %v1652 = vadd.f32 %v628, %v1140
      %v1653 = vadd.f32 %v629, %v1141
      %v1654 = vadd.f32 %v630, %v1142
      %v1655 = vadd.f32 %v631, %v1143
      %v1656 = vadd.f32 %v632, %v1144
      %v1657 = vadd.f32 %v633, %v1145
      %v1658 = vadd.f32 %v634, %v1146
      %v1659 = vadd.f32 %v635, %v1147
      %v1660 = vadd.f32 %v636, %v1148
      %v1661 = vadd.f32 %v637, %v1149
      %v1662 = vadd.f32 %v638, %v1150
      %v1663 = vadd.f32 %v639, %v1151
      %v1664 = vadd.f32 %v640, %v1152
      %v1665 = vadd.f32 %v641, %v1153
      %v1666 = vadd.f32 %v642, %v1154
      %v1667 = vadd.f32 %v643, %v1155
      %v1668 = vadd.f32 %v644, %v1156
      %v1669 = vadd.f32 %v645, %v1157
      %v1670 = vadd.f32 %v646, %v1158
      %v1671 = vadd.f32 %v647, %v1159
      %v1672 = vadd.f32 %v648, %v1160
      %v1673 = vadd.f32 %v649, %v1161
      %v1674 = vadd.f32 %v650, %v1162
      %v1675 = vadd.f32 %v651, %v1163
      %v1676 = vadd.f32 %v652, %v1164
      %v1677 = vadd.f32 %v653, %v1165
      %v1678 = vadd.f32 %v654, %v1166
      %v1679 = vadd.f32 %v655, %v1167
      %v1680 = vadd.f32 %v656, %v1168
      %v1681 = vadd.f32 %v657, %v1169
      %v1682 = vadd.f32 %v658, %v1170
      %v1683 = vadd.f32 %v659, %v1171
      %v1684 = vadd.f32 %v660, %v1172
      %v1685 = vadd.f32 %v661, %v1173
      %v1686 = vadd.f32 %v662, %v1174
      %v1687 = vadd.f32 %v663, %v1175
      %v1688 = vadd.f32 %v664, %v1176
      %v1689 = vadd.f32 %v665, %v1177
      %v1690 = vadd.f32 %v666, %v1178
      %v1691 = vadd.f32 %v667, %v1179
      %v1692 = vadd.f32 %v668, %v1180
      %v1693 = vadd.f32 %v669, %v1181
      %v1694 = vadd.f32 %v670, %v1182
      %v1695 = vadd.f32 %v671, %v1183
      %v1696 = vadd.f32 %v672, %v1184
      %v1697 = vadd.f32 %v673, %v1185
      %v1698 = vadd.f32 %v674, %v1186
      %v1699 = vadd.f32 %v675, %v1187
      %v1700 = vadd.f32 %v676, %v1188
      %v1701 = vadd.f32 %v677, %v1189
      %v1702 = vadd.f32 %v678, %v1190
      %v1703 = vadd.f32 %v679, %v1191
      %v1704 = vadd.f32 %v680, %v1192
      %v1705 = vadd.f32 %v681, %v1193
      %v1706 = vadd.f32 %v682, %v1194
      %v1707 = vadd.f32 %v683, %v1195
      %v1708 = vadd.f32 %v684, %v1196
      %v1709 = vadd.f32 %v685, %v1197
      %v1710 = vadd.f32 %v686, %v1198
      %v1711 = vadd.f32 %v687, %v1199
      %v1712 = vadd.f32 %v688, %v1200
      %1713 = vst [vmem:[%s175] sm:$0xff] %v1201
      %1714 = vst [vmem:[%s175 + $0x8] sm:$0xff] %v1202
      %1715 = vst [vmem:[%s175 + $0x10] sm:$0xff] %v1203
      %1716 = vst [vmem:[%s175 + $0x18] sm:$0xff] %v1204
      %1717 = vst [vmem:[%s175 + $0x20] sm:$0xff] %v1205
      %1718 = vst [vmem:[%s175 + $0x28] sm:$0xff] %v1206
      %1719 = vst [vmem:[%s175 + $0x30] sm:$0xff] %v1207
      %1720 = vst [vmem:[%s175 + $0x38] sm:$0xff] %v1208
      %1721 = vst [vmem:[%s175 + $0x40] sm:$0xff] %v1209
      %1722 = vst [vmem:[%s175 + $0x48] sm:$0xff] %v1210
      %1723 = vst [vmem:[%s175 + $0x50] sm:$0xff] %v1211
      %1724 = vst [vmem:[%s175 + $0x58] sm:$0xff] %v1212
      %1725 = vst [vmem:[%s175 + $0x60] sm:$0xff] %v1213
      %1726 = vst [vmem:[%s175 + $0x68] sm:$0xff] %v1214
      %1727 = vst [vmem:[%s175 + $0x70] sm:$0xff] %v1215
      %1728 = vst [vmem:[%s175 + $0x78] sm:$0xff] %v1216
      %1729 = vst [vmem:[%s175 + $0x80] sm:$0xff] %v1217
      %1730 = vst [vmem:[%s175 + $0x88] sm:$0xff] %v1218
      %1731 = vst [vmem:[%s175 + $0x90] sm:$0xff] %v1219
      %1732 = vst [vmem:[%s175 + $0x98] sm:$0xff] %v1220
      %1733 = vst [vmem:[%s175 + $0xa0] sm:$0xff] %v1221
      %1734 = vst [vmem:[%s175 + $0xa8] sm:$0xff] %v1222
      %1735 = vst [vmem:[%s175 + $0xb0] sm:$0xff] %v1223
      %1736 = vst [vmem:[%s175 + $0xb8] sm:$0xff] %v1224
      %1737 = vst [vmem:[%s175 + $0xc0] sm:$0xff] %v1225
      %1738 = vst [vmem:[%s175 + $0xc8] sm:$0xff] %v1226
      %1739 = vst [vmem:[%s175 + $0xd0] sm:$0xff] %v1227
      %1740 = vst [vmem:[%s175 + $0xd8] sm:$0xff] %v1228
      %1741 = vst [vmem:[%s175 + $0xe0] sm:$0xff] %v1229
      %1742 = vst [vmem:[%s175 + $0xe8] sm:$0xff] %v1230
      %1743 = vst [vmem:[%s175 + $0xf0] sm:$0xff] %v1231
      %1744 = vst [vmem:[%s175 + $0xf8] sm:$0xff] %v1232
      %1745 = vst [vmem:[%s175 + $0x100] sm:$0xff] %v1233
      %1746 = vst [vmem:[%s175 + $0x108] sm:$0xff] %v1234
      %1747 = vst [vmem:[%s175 + $0x110] sm:$0xff] %v1235
      %1748 = vst [vmem:[%s175 + $0x118] sm:$0xff] %v1236
      %1749 = vst [vmem:[%s175 + $0x120] sm:$0xff] %v1237
      %1750 = vst [vmem:[%s175 + $0x128] sm:$0xff] %v1238
      %1751 = vst [vmem:[%s175 + $0x130] sm:$0xff] %v1239
      %1752 = vst [vmem:[%s175 + $0x138] sm:$0xff] %v1240
      %1753 = vst [vmem:[%s175 + $0x140] sm:$0xff] %v1241
      %1754 = vst [vmem:[%s175 + $0x148] sm:$0xff] %v1242
      %1755 = vst [vmem:[%s175 + $0x150] sm:$0xff] %v1243
      %1756 = vst [vmem:[%s175 + $0x158] sm:$0xff] %v1244
      %1757 = vst [vmem:[%s175 + $0x160] sm:$0xff] %v1245
      %1758 = vst [vmem:[%s175 + $0x168] sm:$0xff] %v1246
      %1759 = vst [vmem:[%s175 + $0x170] sm:$0xff] %v1247
      %1760 = vst [vmem:[%s175 + $0x178] sm:$0xff] %v1248
      %1761 = vst [vmem:[%s175 + $0x180] sm:$0xff] %v1249
      %1762 = vst [vmem:[%s175 + $0x188] sm:$0xff] %v1250
      %1763 = vst [vmem:[%s175 + $0x190] sm:$0xff] %v1251
      %1764 = vst [vmem:[%s175 + $0x198] sm:$0xff] %v1252
      %1765 = vst [vmem:[%s175 + $0x1a0] sm:$0xff] %v1253
      %1766 = vst [vmem:[%s175 + $0x1a8] sm:$0xff] %v1254
      %1767 = vst [vmem:[%s175 + $0x1b0] sm:$0xff] %v1255
      %1768 = vst [vmem:[%s175 + $0x1b8] sm:$0xff] %v1256
      %1769 = vst [vmem:[%s175 + $0x1c0] sm:$0xff] %v1257
      %1770 = vst [vmem:[%s175 + $0x1c8] sm:$0xff] %v1258
      %1771 = vst [vmem:[%s175 + $0x1d0] sm:$0xff] %v1259
      %1772 = vst [vmem:[%s175 + $0x1d8] sm:$0xff] %v1260
      %1773 = vst [vmem:[%s175 + $0x1e0] sm:$0xff] %v1261
      %1774 = vst [vmem:[%s175 + $0x1e8] sm:$0xff] %v1262
      %1775 = vst [vmem:[%s175 + $0x1f0] sm:$0xff] %v1263
      %1776 = vst [vmem:[%s175 + $0x1f8] sm:$0xff] %v1264
      %1777 = vst [vmem:[%s175 + $0x200] sm:$0xff] %v1265
      %1778 = vst [vmem:[%s175 + $0x208] sm:$0xff] %v1266
      %1779 = vst [vmem:[%s175 + $0x210] sm:$0xff] %v1267
      %1780 = vst [vmem:[%s175 + $0x218] sm:$0xff] %v1268
      %1781 = vst [vmem:[%s175 + $0x220] sm:$0xff] %v1269
      %1782 = vst [vmem:[%s175 + $0x228] sm:$0xff] %v1270
      %1783 = vst [vmem:[%s175 + $0x230] sm:$0xff] %v1271
      %1784 = vst [vmem:[%s175 + $0x238] sm:$0xff] %v1272
      %1785 = vst [vmem:[%s175 + $0x240] sm:$0xff] %v1273
      %1786 = vst [vmem:[%s175 + $0x248] sm:$0xff] %v1274
      %1787 = vst [vmem:[%s175 + $0x250] sm:$0xff] %v1275
      %1788 = vst [vmem:[%s175 + $0x258] sm:$0xff] %v1276
      %1789 = vst [vmem:[%s175 + $0x260] sm:$0xff] %v1277
      %1790 = vst [vmem:[%s175 + $0x268] sm:$0xff] %v1278
      %1791 = vst [vmem:[%s175 + $0x270] sm:$0xff] %v1279
      %1792 = vst [vmem:[%s175 + $0x278] sm:$0xff] %v1280
      %1793 = vst [vmem:[%s175 + $0x280] sm:$0xff] %v1281
      %1794 = vst [vmem:[%s175 + $0x288] sm:$0xff] %v1282
      %1795 = vst [vmem:[%s175 + $0x290] sm:$0xff] %v1283
      %1796 = vst [vmem:[%s175 + $0x298] sm:$0xff] %v1284
      %1797 = vst [vmem:[%s175 + $0x2a0] sm:$0xff] %v1285
      %1798 = vst [vmem:[%s175 + $0x2a8] sm:$0xff] %v1286
      %1799 = vst [vmem:[%s175 + $0x2b0] sm:$0xff] %v1287
      %1800 = vst [vmem:[%s175 + $0x2b8] sm:$0xff] %v1288
      %1801 = vst [vmem:[%s175 + $0x2c0] sm:$0xff] %v1289
      %1802 = vst [vmem:[%s175 + $0x2c8] sm:$0xff] %v1290
      %1803 = vst [vmem:[%s175 + $0x2d0] sm:$0xff] %v1291
      %1804 = vst [vmem:[%s175 + $0x2d8] sm:$0xff] %v1292
      %1805 = vst [vmem:[%s175 + $0x2e0] sm:$0xff] %v1293
      %1806 = vst [vmem:[%s175 + $0x2e8] sm:$0xff] %v1294
      %1807 = vst [vmem:[%s175 + $0x2f0] sm:$0xff] %v1295
      %1808 = vst [vmem:[%s175 + $0x2f8] sm:$0xff] %v1296
      %1809 = vst [vmem:[%s175 + $0x300] sm:$0xff] %v1297
      %1810 = vst [vmem:[%s175 + $0x308] sm:$0xff] %v1298
      %1811 = vst [vmem:[%s175 + $0x310] sm:$0xff] %v1299
      %1812 = vst [vmem:[%s175 + $0x318] sm:$0xff] %v1300
      %1813 = vst [vmem:[%s175 + $0x320] sm:$0xff] %v1301
      %1814 = vst [vmem:[%s175 + $0x328] sm:$0xff] %v1302
      %1815 = vst [vmem:[%s175 + $0x330] sm:$0xff] %v1303
      %1816 = vst [vmem:[%s175 + $0x338] sm:$0xff] %v1304
      %1817 = vst [vmem:[%s175 + $0x340] sm:$0xff] %v1305
      %1818 = vst [vmem:[%s175 + $0x348] sm:$0xff] %v1306
      %1819 = vst [vmem:[%s175 + $0x350] sm:$0xff] %v1307
      %1820 = vst [vmem:[%s175 + $0x358] sm:$0xff] %v1308
      %1821 = vst [vmem:[%s175 + $0x360] sm:$0xff] %v1309
      %1822 = vst [vmem:[%s175 + $0x368] sm:$0xff] %v1310
      %1823 = vst [vmem:[%s175 + $0x370] sm:$0xff] %v1311
      %1824 = vst [vmem:[%s175 + $0x378] sm:$0xff] %v1312
      %1825 = vst [vmem:[%s175 + $0x380] sm:$0xff] %v1313
      %1826 = vst [vmem:[%s175 + $0x388] sm:$0xff] %v1314
      %1827 = vst [vmem:[%s175 + $0x390] sm:$0xff] %v1315
      %1828 = vst [vmem:[%s175 + $0x398] sm:$0xff] %v1316
      %1829 = vst [vmem:[%s175 + $0x3a0] sm:$0xff] %v1317
      %1830 = vst [vmem:[%s175 + $0x3a8] sm:$0xff] %v1318
      %1831 = vst [vmem:[%s175 + $0x3b0] sm:$0xff] %v1319
      %1832 = vst [vmem:[%s175 + $0x3b8] sm:$0xff] %v1320
      %1833 = vst [vmem:[%s175 + $0x3c0] sm:$0xff] %v1321
      %1834 = vst [vmem:[%s175 + $0x3c8] sm:$0xff] %v1322
      %1835 = vst [vmem:[%s175 + $0x3d0] sm:$0xff] %v1323
      %1836 = vst [vmem:[%s175 + $0x3d8] sm:$0xff] %v1324
      %1837 = vst [vmem:[%s175 + $0x3e0] sm:$0xff] %v1325
      %1838 = vst [vmem:[%s175 + $0x3e8] sm:$0xff] %v1326
      %1839 = vst [vmem:[%s175 + $0x3f0] sm:$0xff] %v1327
      %1840 = vst [vmem:[%s175 + $0x3f8] sm:$0xff] %v1328
      %1841 = vst [vmem:[%s175 + $0x400] sm:$0xff] %v1329
      %1842 = vst [vmem:[%s175 + $0x408] sm:$0xff] %v1330
      %1843 = vst [vmem:[%s175 + $0x410] sm:$0xff] %v1331
      %1844 = vst [vmem:[%s175 + $0x418] sm:$0xff] %v1332
      %1845 = vst [vmem:[%s175 + $0x420] sm:$0xff] %v1333
      %1846 = vst [vmem:[%s175 + $0x428] sm:$0xff] %v1334
      %1847 = vst [vmem:[%s175 + $0x430] sm:$0xff] %v1335
      %1848 = vst [vmem:[%s175 + $0x438] sm:$0xff] %v1336
      %1849 = vst [vmem:[%s175 + $0x440] sm:$0xff] %v1337
      %1850 = vst [vmem:[%s175 + $0x448] sm:$0xff] %v1338
      %1851 = vst [vmem:[%s175 + $0x450] sm:$0xff] %v1339
      %1852 = vst [vmem:[%s175 + $0x458] sm:$0xff] %v1340
      %1853 = vst [vmem:[%s175 + $0x460] sm:$0xff] %v1341
      %1854 = vst [vmem:[%s175 + $0x468] sm:$0xff] %v1342
      %1855 = vst [vmem:[%s175 + $0x470] sm:$0xff] %v1343
      %1856 = vst [vmem:[%s175 + $0x478] sm:$0xff] %v1344
      %1857 = vst [vmem:[%s175 + $0x480] sm:$0xff] %v1345
      %1858 = vst [vmem:[%s175 + $0x488] sm:$0xff] %v1346
      %1859 = vst [vmem:[%s175 + $0x490] sm:$0xff] %v1347
      %1860 = vst [vmem:[%s175 + $0x498] sm:$0xff] %v1348
      %1861 = vst [vmem:[%s175 + $0x4a0] sm:$0xff] %v1349
      %1862 = vst [vmem:[%s175 + $0x4a8] sm:$0xff] %v1350
      %1863 = vst [vmem:[%s175 + $0x4b0] sm:$0xff] %v1351
      %1864 = vst [vmem:[%s175 + $0x4b8] sm:$0xff] %v1352
      %1865 = vst [vmem:[%s175 + $0x4c0] sm:$0xff] %v1353
      %1866 = vst [vmem:[%s175 + $0x4c8] sm:$0xff] %v1354
      %1867 = vst [vmem:[%s175 + $0x4d0] sm:$0xff] %v1355
      %1868 = vst [vmem:[%s175 + $0x4d8] sm:$0xff] %v1356
      %1869 = vst [vmem:[%s175 + $0x4e0] sm:$0xff] %v1357
      %1870 = vst [vmem:[%s175 + $0x4e8] sm:$0xff] %v1358
      %1871 = vst [vmem:[%s175 + $0x4f0] sm:$0xff] %v1359
      %1872 = vst [vmem:[%s175 + $0x4f8] sm:$0xff] %v1360
      %1873 = vst [vmem:[%s175 + $0x500] sm:$0xff] %v1361
      %1874 = vst [vmem:[%s175 + $0x508] sm:$0xff] %v1362
      %1875 = vst [vmem:[%s175 + $0x510] sm:$0xff] %v1363
      %1876 = vst [vmem:[%s175 + $0x518] sm:$0xff] %v1364
      %1877 = vst [vmem:[%s175 + $0x520] sm:$0xff] %v1365
      %1878 = vst [vmem:[%s175 + $0x528] sm:$0xff] %v1366
      %1879 = vst [vmem:[%s175 + $0x530] sm:$0xff] %v1367
      %1880 = vst [vmem:[%s175 + $0x538] sm:$0xff] %v1368
      %1881 = vst [vmem:[%s175 + $0x540] sm:$0xff] %v1369
      %1882 = vst [vmem:[%s175 + $0x548] sm:$0xff] %v1370
      %1883 = vst [vmem:[%s175 + $0x550] sm:$0xff] %v1371
      %1884 = vst [vmem:[%s175 + $0x558] sm:$0xff] %v1372
      %1885 = vst [vmem:[%s175 + $0x560] sm:$0xff] %v1373
      %1886 = vst [vmem:[%s175 + $0x568] sm:$0xff] %v1374
      %1887 = vst [vmem:[%s175 + $0x570] sm:$0xff] %v1375
      %1888 = vst [vmem:[%s175 + $0x578] sm:$0xff] %v1376
      %1889 = vst [vmem:[%s175 + $0x580] sm:$0xff] %v1377
      %1890 = vst [vmem:[%s175 + $0x588] sm:$0xff] %v1378
      %1891 = vst [vmem:[%s175 + $0x590] sm:$0xff] %v1379
      %1892 = vst [vmem:[%s175 + $0x598] sm:$0xff] %v1380
      %1893 = vst [vmem:[%s175 + $0x5a0] sm:$0xff] %v1381
      %1894 = vst [vmem:[%s175 + $0x5a8] sm:$0xff] %v1382
      %1895 = vst [vmem:[%s175 + $0x5b0] sm:$0xff] %v1383
      %1896 = vst [vmem:[%s175 + $0x5b8] sm:$0xff] %v1384
      %1897 = vst [vmem:[%s175 + $0x5c0] sm:$0xff] %v1385
      %1898 = vst [vmem:[%s175 + $0x5c8] sm:$0xff] %v1386
      %1899 = vst [vmem:[%s175 + $0x5d0] sm:$0xff] %v1387
      %1900 = vst [vmem:[%s175 + $0x5d8] sm:$0xff] %v1388
      %1901 = vst [vmem:[%s175 + $0x5e0] sm:$0xff] %v1389
      %1902 = vst [vmem:[%s175 + $0x5e8] sm:$0xff] %v1390
      %1903 = vst [vmem:[%s175 + $0x5f0] sm:$0xff] %v1391
      %1904 = vst [vmem:[%s175 + $0x5f8] sm:$0xff] %v1392
      %1905 = vst [vmem:[%s175 + $0x600] sm:$0xff] %v1393
      %1906 = vst [vmem:[%s175 + $0x608] sm:$0xff] %v1394
      %1907 = vst [vmem:[%s175 + $0x610] sm:$0xff] %v1395
      %1908 = vst [vmem:[%s175 + $0x618] sm:$0xff] %v1396
      %1909 = vst [vmem:[%s175 + $0x620] sm:$0xff] %v1397
      %1910 = vst [vmem:[%s175 + $0x628] sm:$0xff] %v1398
      %1911 = vst [vmem:[%s175 + $0x630] sm:$0xff] %v1399
      %1912 = vst [vmem:[%s175 + $0x638] sm:$0xff] %v1400
      %1913 = vst [vmem:[%s175 + $0x640] sm:$0xff] %v1401
      %1914 = vst [vmem:[%s175 + $0x648] sm:$0xff] %v1402
      %1915 = vst [vmem:[%s175 + $0x650] sm:$0xff] %v1403
      %1916 = vst [vmem:[%s175 + $0x658] sm:$0xff] %v1404
      %1917 = vst [vmem:[%s175 + $0x660] sm:$0xff] %v1405
      %1918 = vst [vmem:[%s175 + $0x668] sm:$0xff] %v1406
      %1919 = vst [vmem:[%s175 + $0x670] sm:$0xff] %v1407
      %1920 = vst [vmem:[%s175 + $0x678] sm:$0xff] %v1408
      %1921 = vst [vmem:[%s175 + $0x680] sm:$0xff] %v1409
      %1922 = vst [vmem:[%s175 + $0x688] sm:$0xff] %v1410
      %1923 = vst [vmem:[%s175 + $0x690] sm:$0xff] %v1411
      %1924 = vst [vmem:[%s175 + $0x698] sm:$0xff] %v1412
      %1925 = vst [vmem:[%s175 + $0x6a0] sm:$0xff] %v1413
      %1926 = vst [vmem:[%s175 + $0x6a8] sm:$0xff] %v1414
      %1927 = vst [vmem:[%s175 + $0x6b0] sm:$0xff] %v1415
      %1928 = vst [vmem:[%s175 + $0x6b8] sm:$0xff] %v1416
      %1929 = vst [vmem:[%s175 + $0x6c0] sm:$0xff] %v1417
      %1930 = vst [vmem:[%s175 + $0x6c8] sm:$0xff] %v1418
      %1931 = vst [vmem:[%s175 + $0x6d0] sm:$0xff] %v1419
      %1932 = vst [vmem:[%s175 + $0x6d8] sm:$0xff] %v1420
      %1933 = vst [vmem:[%s175 + $0x6e0] sm:$0xff] %v1421
      %1934 = vst [vmem:[%s175 + $0x6e8] sm:$0xff] %v1422
      %1935 = vst [vmem:[%s175 + $0x6f0] sm:$0xff] %v1423
      %1936 = vst [vmem:[%s175 + $0x6f8] sm:$0xff] %v1424
      %1937 = vst [vmem:[%s175 + $0x700] sm:$0xff] %v1425
      %1938 = vst [vmem:[%s175 + $0x708] sm:$0xff] %v1426
      %1939 = vst [vmem:[%s175 + $0x710] sm:$0xff] %v1427
      %1940 = vst [vmem:[%s175 + $0x718] sm:$0xff] %v1428
      %1941 = vst [vmem:[%s175 + $0x720] sm:$0xff] %v1429
      %1942 = vst [vmem:[%s175 + $0x728] sm:$0xff] %v1430
      %1943 = vst [vmem:[%s175 + $0x730] sm:$0xff] %v1431
      %1944 = vst [vmem:[%s175 + $0x738] sm:$0xff] %v1432
      %1945 = vst [vmem:[%s175 + $0x740] sm:$0xff] %v1433
      %1946 = vst [vmem:[%s175 + $0x748] sm:$0xff] %v1434
      %1947 = vst [vmem:[%s175 + $0x750] sm:$0xff] %v1435
      %1948 = vst [vmem:[%s175 + $0x758] sm:$0xff] %v1436
      %1949 = vst [vmem:[%s175 + $0x760] sm:$0xff] %v1437
      %1950 = vst [vmem:[%s175 + $0x768] sm:$0xff] %v1438
      %1951 = vst [vmem:[%s175 + $0x770] sm:$0xff] %v1439
      %1952 = vst [vmem:[%s175 + $0x778] sm:$0xff] %v1440
      %1953 = vst [vmem:[%s175 + $0x780] sm:$0xff] %v1441
      %1954 = vst [vmem:[%s175 + $0x788] sm:$0xff] %v1442
      %1955 = vst [vmem:[%s175 + $0x790] sm:$0xff] %v1443
      %1956 = vst [vmem:[%s175 + $0x798] sm:$0xff] %v1444
      %1957 = vst [vmem:[%s175 + $0x7a0] sm:$0xff] %v1445
      %1958 = vst [vmem:[%s175 + $0x7a8] sm:$0xff] %v1446
      %1959 = vst [vmem:[%s175 + $0x7b0] sm:$0xff] %v1447
      %1960 = vst [vmem:[%s175 + $0x7b8] sm:$0xff] %v1448
      %1961 = vst [vmem:[%s175 + $0x7c0] sm:$0xff] %v1449
      %1962 = vst [vmem:[%s175 + $0x7c8] sm:$0xff] %v1450
      %1963 = vst [vmem:[%s175 + $0x7d0] sm:$0xff] %v1451
      %1964 = vst [vmem:[%s175 + $0x7d8] sm:$0xff] %v1452
      %1965 = vst [vmem:[%s175 + $0x7e0] sm:$0xff] %v1453
      %1966 = vst [vmem:[%s175 + $0x7e8] sm:$0xff] %v1454
      %1967 = vst [vmem:[%s175 + $0x7f0] sm:$0xff] %v1455
      %1968 = vst [vmem:[%s175 + $0x7f8] sm:$0xff] %v1456
      %1969 = vst [vmem:[%s175 + $0x800] sm:$0xff] %v1457
      %1970 = vst [vmem:[%s175 + $0x808] sm:$0xff] %v1458
      %1971 = vst [vmem:[%s175 + $0x810] sm:$0xff] %v1459
      %1972 = vst [vmem:[%s175 + $0x818] sm:$0xff] %v1460
      %1973 = vst [vmem:[%s175 + $0x820] sm:$0xff] %v1461
      %1974 = vst [vmem:[%s175 + $0x828] sm:$0xff] %v1462
      %1975 = vst [vmem:[%s175 + $0x830] sm:$0xff] %v1463
      %1976 = vst [vmem:[%s175 + $0x838] sm:$0xff] %v1464
      %1977 = vst [vmem:[%s175 + $0x840] sm:$0xff] %v1465
      %1978 = vst [vmem:[%s175 + $0x848] sm:$0xff] %v1466
      %1979 = vst [vmem:[%s175 + $0x850] sm:$0xff] %v1467
      %1980 = vst [vmem:[%s175 + $0x858] sm:$0xff] %v1468
      %1981 = vst [vmem:[%s175 + $0x860] sm:$0xff] %v1469
      %1982 = vst [vmem:[%s175 + $0x868] sm:$0xff] %v1470
      %1983 = vst [vmem:[%s175 + $0x870] sm:$0xff] %v1471
      %1984 = vst [vmem:[%s175 + $0x878] sm:$0xff] %v1472
      %1985 = vst [vmem:[%s175 + $0x880] sm:$0xff] %v1473
      %1986 = vst [vmem:[%s175 + $0x888] sm:$0xff] %v1474
      %1987 = vst [vmem:[%s175 + $0x890] sm:$0xff] %v1475
      %1988 = vst [vmem:[%s175 + $0x898] sm:$0xff] %v1476
      %1989 = vst [vmem:[%s175 + $0x8a0] sm:$0xff] %v1477
      %1990 = vst [vmem:[%s175 + $0x8a8] sm:$0xff] %v1478
      %1991 = vst [vmem:[%s175 + $0x8b0] sm:$0xff] %v1479
      %1992 = vst [vmem:[%s175 + $0x8b8] sm:$0xff] %v1480
      %1993 = vst [vmem:[%s175 + $0x8c0] sm:$0xff] %v1481
      %1994 = vst [vmem:[%s175 + $0x8c8] sm:$0xff] %v1482
      %1995 = vst [vmem:[%s175 + $0x8d0] sm:$0xff] %v1483
      %1996 = vst [vmem:[%s175 + $0x8d8] sm:$0xff] %v1484
      %1997 = vst [vmem:[%s175 + $0x8e0] sm:$0xff] %v1485
      %1998 = vst [vmem:[%s175 + $0x8e8] sm:$0xff] %v1486
      %1999 = vst [vmem:[%s175 + $0x8f0] sm:$0xff] %v1487
      %2000 = vst [vmem:[%s175 + $0x8f8] sm:$0xff] %v1488
      %2001 = vst [vmem:[%s175 + $0x900] sm:$0xff] %v1489
      %2002 = vst [vmem:[%s175 + $0x908] sm:$0xff] %v1490
      %2003 = vst [vmem:[%s175 + $0x910] sm:$0xff] %v1491
      %2004 = vst [vmem:[%s175 + $0x918] sm:$0xff] %v1492
      %2005 = vst [vmem:[%s175 + $0x920] sm:$0xff] %v1493
      %2006 = vst [vmem:[%s175 + $0x928] sm:$0xff] %v1494
      %2007 = vst [vmem:[%s175 + $0x930] sm:$0xff] %v1495
      %2008 = vst [vmem:[%s175 + $0x938] sm:$0xff] %v1496
      %2009 = vst [vmem:[%s175 + $0x940] sm:$0xff] %v1497
      %2010 = vst [vmem:[%s175 + $0x948] sm:$0xff] %v1498
      %2011 = vst [vmem:[%s175 + $0x950] sm:$0xff] %v1499
      %2012 = vst [vmem:[%s175 + $0x958] sm:$0xff] %v1500
      %2013 = vst [vmem:[%s175 + $0x960] sm:$0xff] %v1501
      %2014 = vst [vmem:[%s175 + $0x968] sm:$0xff] %v1502
      %2015 = vst [vmem:[%s175 + $0x970] sm:$0xff] %v1503
      %2016 = vst [vmem:[%s175 + $0x978] sm:$0xff] %v1504
      %2017 = vst [vmem:[%s175 + $0x980] sm:$0xff] %v1505
      %2018 = vst [vmem:[%s175 + $0x988] sm:$0xff] %v1506
      %2019 = vst [vmem:[%s175 + $0x990] sm:$0xff] %v1507
      %2020 = vst [vmem:[%s175 + $0x998] sm:$0xff] %v1508
      %2021 = vst [vmem:[%s175 + $0x9a0] sm:$0xff] %v1509
      %2022 = vst [vmem:[%s175 + $0x9a8] sm:$0xff] %v1510
      %2023 = vst [vmem:[%s175 + $0x9b0] sm:$0xff] %v1511
      %2024 = vst [vmem:[%s175 + $0x9b8] sm:$0xff] %v1512
      %2025 = vst [vmem:[%s175 + $0x9c0] sm:$0xff] %v1513
      %2026 = vst [vmem:[%s175 + $0x9c8] sm:$0xff] %v1514
      %2027 = vst [vmem:[%s175 + $0x9d0] sm:$0xff] %v1515
      %2028 = vst [vmem:[%s175 + $0x9d8] sm:$0xff] %v1516
      %2029 = vst [vmem:[%s175 + $0x9e0] sm:$0xff] %v1517
      %2030 = vst [vmem:[%s175 + $0x9e8] sm:$0xff] %v1518
      %2031 = vst [vmem:[%s175 + $0x9f0] sm:$0xff] %v1519
      %2032 = vst [vmem:[%s175 + $0x9f8] sm:$0xff] %v1520
      %2033 = vst [vmem:[%s175 + $0xa00] sm:$0xff] %v1521
      %2034 = vst [vmem:[%s175 + $0xa08] sm:$0xff] %v1522
      %2035 = vst [vmem:[%s175 + $0xa10] sm:$0xff] %v1523
      %2036 = vst [vmem:[%s175 + $0xa18] sm:$0xff] %v1524
      %2037 = vst [vmem:[%s175 + $0xa20] sm:$0xff] %v1525
      %2038 = vst [vmem:[%s175 + $0xa28] sm:$0xff] %v1526
      %2039 = vst [vmem:[%s175 + $0xa30] sm:$0xff] %v1527
      %2040 = vst [vmem:[%s175 + $0xa38] sm:$0xff] %v1528
      %2041 = vst [vmem:[%s175 + $0xa40] sm:$0xff] %v1529
      %2042 = vst [vmem:[%s175 + $0xa48] sm:$0xff] %v1530
      %2043 = vst [vmem:[%s175 + $0xa50] sm:$0xff] %v1531
      %2044 = vst [vmem:[%s175 + $0xa58] sm:$0xff] %v1532
      %2045 = vst [vmem:[%s175 + $0xa60] sm:$0xff] %v1533
      %2046 = vst [vmem:[%s175 + $0xa68] sm:$0xff] %v1534
      %2047 = vst [vmem:[%s175 + $0xa70] sm:$0xff] %v1535
      %2048 = vst [vmem:[%s175 + $0xa78] sm:$0xff] %v1536
      %2049 = vst [vmem:[%s175 + $0xa80] sm:$0xff] %v1537
      %2050 = vst [vmem:[%s175 + $0xa88] sm:$0xff] %v1538
      %2051 = vst [vmem:[%s175 + $0xa90] sm:$0xff] %v1539
      %2052 = vst [vmem:[%s175 + $0xa98] sm:$0xff] %v1540
      %2053 = vst [vmem:[%s175 + $0xaa0] sm:$0xff] %v1541
      %2054 = vst [vmem:[%s175 + $0xaa8] sm:$0xff] %v1542
      %2055 = vst [vmem:[%s175 + $0xab0] sm:$0xff] %v1543
      %2056 = vst [vmem:[%s175 + $0xab8] sm:$0xff] %v1544
      %2057 = vst [vmem:[%s175 + $0xac0] sm:$0xff] %v1545
      %2058 = vst [vmem:[%s175 + $0xac8] sm:$0xff] %v1546
      %2059 = vst [vmem:[%s175 + $0xad0] sm:$0xff] %v1547
      %2060 = vst [vmem:[%s175 + $0xad8] sm:$0xff] %v1548
      %2061 = vst [vmem:[%s175 + $0xae0] sm:$0xff] %v1549
      %2062 = vst [vmem:[%s175 + $0xae8] sm:$0xff] %v1550
      %2063 = vst [vmem:[%s175 + $0xaf0] sm:$0xff] %v1551
      %2064 = vst [vmem:[%s175 + $0xaf8] sm:$0xff] %v1552
      %2065 = vst [vmem:[%s175 + $0xb00] sm:$0xff] %v1553
      %2066 = vst [vmem:[%s175 + $0xb08] sm:$0xff] %v1554
      %2067 = vst [vmem:[%s175 + $0xb10] sm:$0xff] %v1555
      %2068 = vst [vmem:[%s175 + $0xb18] sm:$0xff] %v1556
      %2069 = vst [vmem:[%s175 + $0xb20] sm:$0xff] %v1557
      %2070 = vst [vmem:[%s175 + $0xb28] sm:$0xff] %v1558
      %2071 = vst [vmem:[%s175 + $0xb30] sm:$0xff] %v1559
      %2072 = vst [vmem:[%s175 + $0xb38] sm:$0xff] %v1560
      %2073 = vst [vmem:[%s175 + $0xb40] sm:$0xff] %v1561
      %2074 = vst [vmem:[%s175 + $0xb48] sm:$0xff] %v1562
      %2075 = vst [vmem:[%s175 + $0xb50] sm:$0xff] %v1563
      %2076 = vst [vmem:[%s175 + $0xb58] sm:$0xff] %v1564
      %2077 = vst [vmem:[%s175 + $0xb60] sm:$0xff] %v1565
      %2078 = vst [vmem:[%s175 + $0xb68] sm:$0xff] %v1566
      %2079 = vst [vmem:[%s175 + $0xb70] sm:$0xff] %v1567
      %2080 = vst [vmem:[%s175 + $0xb78] sm:$0xff] %v1568
      %2081 = vst [vmem:[%s175 + $0xb80] sm:$0xff] %v1569
      %2082 = vst [vmem:[%s175 + $0xb88] sm:$0xff] %v1570
      %2083 = vst [vmem:[%s175 + $0xb90] sm:$0xff] %v1571
      %2084 = vst [vmem:[%s175 + $0xb98] sm:$0xff] %v1572
      %2085 = vst [vmem:[%s175 + $0xba0] sm:$0xff] %v1573
      %2086 = vst [vmem:[%s175 + $0xba8] sm:$0xff] %v1574
      %2087 = vst [vmem:[%s175 + $0xbb0] sm:$0xff] %v1575
      %2088 = vst [vmem:[%s175 + $0xbb8] sm:$0xff] %v1576
      %2089 = vst [vmem:[%s175 + $0xbc0] sm:$0xff] %v1577
      %2090 = vst [vmem:[%s175 + $0xbc8] sm:$0xff] %v1578
      %2091 = vst [vmem:[%s175 + $0xbd0] sm:$0xff] %v1579
      %2092 = vst [vmem:[%s175 + $0xbd8] sm:$0xff] %v1580
      %2093 = vst [vmem:[%s175 + $0xbe0] sm:$0xff] %v1581
      %2094 = vst [vmem:[%s175 + $0xbe8] sm:$0xff] %v1582
      %2095 = vst [vmem:[%s175 + $0xbf0] sm:$0xff] %v1583
      %2096 = vst [vmem:[%s175 + $0xbf8] sm:$0xff] %v1584
      %2097 = vst [vmem:[%s175 + $0xc00] sm:$0xff] %v1585
      %2098 = vst [vmem:[%s175 + $0xc08] sm:$0xff] %v1586
      %2099 = vst [vmem:[%s175 + $0xc10] sm:$0xff] %v1587
      %2100 = vst [vmem:[%s175 + $0xc18] sm:$0xff] %v1588
      %2101 = vst [vmem:[%s175 + $0xc20] sm:$0xff] %v1589
      %2102 = vst [vmem:[%s175 + $0xc28] sm:$0xff] %v1590
      %2103 = vst [vmem:[%s175 + $0xc30] sm:$0xff] %v1591
      %2104 = vst [vmem:[%s175 + $0xc38] sm:$0xff] %v1592
      %2105 = vst [vmem:[%s175 + $0xc40] sm:$0xff] %v1593
      %2106 = vst [vmem:[%s175 + $0xc48] sm:$0xff] %v1594
      %2107 = vst [vmem:[%s175 + $0xc50] sm:$0xff] %v1595
      %2108 = vst [vmem:[%s175 + $0xc58] sm:$0xff] %v1596
      %2109 = vst [vmem:[%s175 + $0xc60] sm:$0xff] %v1597
      %2110 = vst [vmem:[%s175 + $0xc68] sm:$0xff] %v1598
      %2111 = vst [vmem:[%s175 + $0xc70] sm:$0xff] %v1599
      %2112 = vst [vmem:[%s175 + $0xc78] sm:$0xff] %v1600
      %2113 = vst [vmem:[%s175 + $0xc80] sm:$0xff] %v1601
      %2114 = vst [vmem:[%s175 + $0xc88] sm:$0xff] %v1602
      %2115 = vst [vmem:[%s175 + $0xc90] sm:$0xff] %v1603
      %2116 = vst [vmem:[%s175 + $0xc98] sm:$0xff] %v1604
      %2117 = vst [vmem:[%s175 + $0xca0] sm:$0xff] %v1605
      %2118 = vst [vmem:[%s175 + $0xca8] sm:$0xff] %v1606
      %2119 = vst [vmem:[%s175 + $0xcb0] sm:$0xff] %v1607
      %2120 = vst [vmem:[%s175 + $0xcb8] sm:$0xff] %v1608
      %2121 = vst [vmem:[%s175 + $0xcc0] sm:$0xff] %v1609
      %2122 = vst [vmem:[%s175 + $0xcc8] sm:$0xff] %v1610
      %2123 = vst [vmem:[%s175 + $0xcd0] sm:$0xff] %v1611
      %2124 = vst [vmem:[%s175 + $0xcd8] sm:$0xff] %v1612
      %2125 = vst [vmem:[%s175 + $0xce0] sm:$0xff] %v1613
      %2126 = vst [vmem:[%s175 + $0xce8] sm:$0xff] %v1614
      %2127 = vst [vmem:[%s175 + $0xcf0] sm:$0xff] %v1615
      %2128 = vst [vmem:[%s175 + $0xcf8] sm:$0xff] %v1616
      %2129 = vst [vmem:[%s175 + $0xd00] sm:$0xff] %v1617
      %2130 = vst [vmem:[%s175 + $0xd08] sm:$0xff] %v1618
      %2131 = vst [vmem:[%s175 + $0xd10] sm:$0xff] %v1619
      %2132 = vst [vmem:[%s175 + $0xd18] sm:$0xff] %v1620
      %2133 = vst [vmem:[%s175 + $0xd20] sm:$0xff] %v1621
      %2134 = vst [vmem:[%s175 + $0xd28] sm:$0xff] %v1622
      %2135 = vst [vmem:[%s175 + $0xd30] sm:$0xff] %v1623
      %2136 = vst [vmem:[%s175 + $0xd38] sm:$0xff] %v1624
      %2137 = vst [vmem:[%s175 + $0xd40] sm:$0xff] %v1625
      %2138 = vst [vmem:[%s175 + $0xd48] sm:$0xff] %v1626
      %2139 = vst [vmem:[%s175 + $0xd50] sm:$0xff] %v1627
      %2140 = vst [vmem:[%s175 + $0xd58] sm:$0xff] %v1628
      %2141 = vst [vmem:[%s175 + $0xd60] sm:$0xff] %v1629
      %2142 = vst [vmem:[%s175 + $0xd68] sm:$0xff] %v1630
      %2143 = vst [vmem:[%s175 + $0xd70] sm:$0xff] %v1631
      %2144 = vst [vmem:[%s175 + $0xd78] sm:$0xff] %v1632
      %2145 = vst [vmem:[%s175 + $0xd80] sm:$0xff] %v1633
      %2146 = vst [vmem:[%s175 + $0xd88] sm:$0xff] %v1634
      %2147 = vst [vmem:[%s175 + $0xd90] sm:$0xff] %v1635
      %2148 = vst [vmem:[%s175 + $0xd98] sm:$0xff] %v1636
      %2149 = vst [vmem:[%s175 + $0xda0] sm:$0xff] %v1637
      %2150 = vst [vmem:[%s175 + $0xda8] sm:$0xff] %v1638
      %2151 = vst [vmem:[%s175 + $0xdb0] sm:$0xff] %v1639
      %2152 = vst [vmem:[%s175 + $0xdb8] sm:$0xff] %v1640
      %2153 = vst [vmem:[%s175 + $0xdc0] sm:$0xff] %v1641
      %2154 = vst [vmem:[%s175 + $0xdc8] sm:$0xff] %v1642
      %2155 = vst [vmem:[%s175 + $0xdd0] sm:$0xff] %v1643
      %2156 = vst [vmem:[%s175 + $0xdd8] sm:$0xff] %v1644
      %2157 = vst [vmem:[%s175 + $0xde0] sm:$0xff] %v1645
      %2158 = vst [vmem:[%s175 + $0xde8] sm:$0xff] %v1646
      %2159 = vst [vmem:[%s175 + $0xdf0] sm:$0xff] %v1647
      %2160 = vst [vmem:[%s175 + $0xdf8] sm:$0xff] %v1648
      %2161 = vst [vmem:[%s175 + $0xe00] sm:$0xff] %v1649
      %2162 = vst [vmem:[%s175 + $0xe08] sm:$0xff] %v1650
      %2163 = vst [vmem:[%s175 + $0xe10] sm:$0xff] %v1651
      %2164 = vst [vmem:[%s175 + $0xe18] sm:$0xff] %v1652
      %2165 = vst [vmem:[%s175 + $0xe20] sm:$0xff] %v1653
      %2166 = vst [vmem:[%s175 + $0xe28] sm:$0xff] %v1654
      %2167 = vst [vmem:[%s175 + $0xe30] sm:$0xff] %v1655
      %2168 = vst [vmem:[%s175 + $0xe38] sm:$0xff] %v1656
      %2169 = vst [vmem:[%s175 + $0xe40] sm:$0xff] %v1657
      %2170 = vst [vmem:[%s175 + $0xe48] sm:$0xff] %v1658
      %2171 = vst [vmem:[%s175 + $0xe50] sm:$0xff] %v1659
      %2172 = vst [vmem:[%s175 + $0xe58] sm:$0xff] %v1660
      %2173 = vst [vmem:[%s175 + $0xe60] sm:$0xff] %v1661
      %2174 = vst [vmem:[%s175 + $0xe68] sm:$0xff] %v1662
      %2175 = vst [vmem:[%s175 + $0xe70] sm:$0xff] %v1663
      %2176 = vst [vmem:[%s175 + $0xe78] sm:$0xff] %v1664
      %2177 = vst [vmem:[%s175 + $0xe80] sm:$0xff] %v1665
      %2178 = vst [vmem:[%s175 + $0xe88] sm:$0xff] %v1666
      %2179 = vst [vmem:[%s175 + $0xe90] sm:$0xff] %v1667
      %2180 = vst [vmem:[%s175 + $0xe98] sm:$0xff] %v1668
      %2181 = vst [vmem:[%s175 + $0xea0] sm:$0xff] %v1669
      %2182 = vst [vmem:[%s175 + $0xea8] sm:$0xff] %v1670
      %2183 = vst [vmem:[%s175 + $0xeb0] sm:$0xff] %v1671
      %2184 = vst [vmem:[%s175 + $0xeb8] sm:$0xff] %v1672
      %2185 = vst [vmem:[%s175 + $0xec0] sm:$0xff] %v1673
      %2186 = vst [vmem:[%s175 + $0xec8] sm:$0xff] %v1674
      %2187 = vst [vmem:[%s175 + $0xed0] sm:$0xff] %v1675
      %2188 = vst [vmem:[%s175 + $0xed8] sm:$0xff] %v1676
      %2189 = vst [vmem:[%s175 + $0xee0] sm:$0xff] %v1677
      %2190 = vst [vmem:[%s175 + $0xee8] sm:$0xff] %v1678
      %2191 = vst [vmem:[%s175 + $0xef0] sm:$0xff] %v1679
      %2192 = vst [vmem:[%s175 + $0xef8] sm:$0xff] %v1680
      %2193 = vst [vmem:[%s175 + $0xf00] sm:$0xff] %v1681
      %2194 = vst [vmem:[%s175 + $0xf08] sm:$0xff] %v1682
      %2195 = vst [vmem:[%s175 + $0xf10] sm:$0xff] %v1683
      %2196 = vst [vmem:[%s175 + $0xf18] sm:$0xff] %v1684
      %2197 = vst [vmem:[%s175 + $0xf20] sm:$0xff] %v1685
      %2198 = vst [vmem:[%s175 + $0xf28] sm:$0xff] %v1686
      %2199 = vst [vmem:[%s175 + $0xf30] sm:$0xff] %v1687
      %2200 = vst [vmem:[%s175 + $0xf38] sm:$0xff] %v1688
      %2201 = vst [vmem:[%s175 + $0xf40] sm:$0xff] %v1689
      %2202 = vst [vmem:[%s175 + $0xf48] sm:$0xff] %v1690
      %2203 = vst [vmem:[%s175 + $0xf50] sm:$0xff] %v1691
      %2204 = vst [vmem:[%s175 + $0xf58] sm:$0xff] %v1692
      %2205 = vst [vmem:[%s175 + $0xf60] sm:$0xff] %v1693
      %2206 = vst [vmem:[%s175 + $0xf68] sm:$0xff] %v1694
      %2207 = vst [vmem:[%s175 + $0xf70] sm:$0xff] %v1695
      %2208 = vst [vmem:[%s175 + $0xf78] sm:$0xff] %v1696
      %2209 = vst [vmem:[%s175 + $0xf80] sm:$0xff] %v1697
      %2210 = vst [vmem:[%s175 + $0xf88] sm:$0xff] %v1698
      %2211 = vst [vmem:[%s175 + $0xf90] sm:$0xff] %v1699
      %2212 = vst [vmem:[%s175 + $0xf98] sm:$0xff] %v1700
      %2213 = vst [vmem:[%s175 + $0xfa0] sm:$0xff] %v1701
      %2214 = vst [vmem:[%s175 + $0xfa8] sm:$0xff] %v1702
      %2215 = vst [vmem:[%s175 + $0xfb0] sm:$0xff] %v1703
      %2216 = vst [vmem:[%s175 + $0xfb8] sm:$0xff] %v1704
      %2217 = vst [vmem:[%s175 + $0xfc0] sm:$0xff] %v1705
      %2218 = vst [vmem:[%s175 + $0xfc8] sm:$0xff] %v1706
      %2219 = vst [vmem:[%s175 + $0xfd0] sm:$0xff] %v1707
      %2220 = vst [vmem:[%s175 + $0xfd8] sm:$0xff] %v1708
      %2221 = vst [vmem:[%s175 + $0xfe0] sm:$0xff] %v1709
      %2222 = vst [vmem:[%s175 + $0xfe8] sm:$0xff] %v1710
      %2223 = vst [vmem:[%s175 + $0xff0] sm:$0xff] %v1711
      %2224 = vst [vmem:[%s175 + $0xff8] sm:$0xff] %v1712
      %s2225 = smul.u32 64, %s13
      %p2226 = scmp.lt.s32.totalorder %s2225, 255
      %s2227 = scalar_select %p2226, %s2225, 255
      %s2228 = smul.addr %s2227, 8
      %s2229 = smul.addr %s2228, 8
      %s2230 = scalar_lea.vmem %s2, %s2229
      // Predicated region
      $region29: #{positional_encoding_add.1} parent=27 // pred_check
        %p2231 = pneg %p83
      $region30: #{positional_encoding_add.1} parent=27 // pred_check_branch
        %2233 = sbr.rel (%p2231) target = $region32
      $region31: #{positional_encoding_add.1} parent=27 // pred_region
        %s2234 = smul.u32 64, %s13
      $region32: #{positional_encoding_add.1} parent=27 // pred_fallthru
        _
    $region28: #{positional_encoding_add.1} parent=5 // pred_fallthru
      _
    %p2235 = scmp.le.s32.totalorder 2, %s8
    // Predicated region
    $region33: #{positional_encoding_add.1} parent=5 // pred_check
      %p2236 = pneg %p2235
    $region34: #{positional_encoding_add.1} parent=5 // pred_check_branch
      %2238 = sbr.rel (%p2236) target = $region36
    $region35: #{positional_encoding_add.1} parent=5 // pred_region
      %s2239 = ssub.s32 %s8, 2
      // Predicated region
      $region37: #{positional_encoding_add.1} parent=35 // pred_check
        %p2240 = pneg %p89
      $region38: #{positional_encoding_add.1} parent=35 // pred_check_branch
        %2242 = sbr.rel (%p2240) target = $region40
      $region39: #{positional_encoding_add.1} parent=35 // pred_region
        %s2243 = smul.u32 64, %s14
        %p2244 = scmp.lt.s32.totalorder %s2243, 255
        %s2245 = scalar_select %p2244, %s2243, 255
        %s2246 = smul.addr %s2245, 8
        %s2247 = smul.addr %s2246, 8
        %s2248 = scalar_lea.vmem %s2, %s2247
      $region40: #{positional_encoding_add.1} parent=35 // pred_fallthru
        _
    $region36: #{positional_encoding_add.1} parent=5 // pred_fallthru
      _
  $region6: #{positional_encoding_add.1} parent=0 // loop_footer
    %s12 = sadd.s32 1, %s8
  $region7: #{positional_encoding_add.1} parent=0 // loop_footer_branch
    %7 = sbr.rel target = $region3
  $region8: #{positional_encoding_add.1} parent=0 // loop_exit
    _

</llo_original>
